<compile_context>
chip_gen: v7x
topology: tpu7x:2x2x1
jax: 0.10.0
libtpu: 0.0.40
codegen_flags: <defaults>
</compile_context>

<pallas_src>
import functools

import jax
import jax.numpy as jnp
from jax import lax
from jax.experimental import pallas as pl
from jax.experimental.pallas import tpu as pltpu


def _parallelnet_kernel(x_ref, wo_ref, ws_ref, wc_ref, o_ref, *, local_steps):
    # x_ref:  (3, TN)       [x0; x1; 1] with the batch on the lane axis
    # wo_ref: (CP, 3)       augmented OpenLayer weights (bias + ones-row folded)
    # ws_ref: (S, CP, CP)   dt-scaled augmented StepLayer weights (row C is zero)
    # wc_ref: (CP, 1)       CloseLayer weights with b_close stored at row C
    # o_ref:  (1, TN)       lane-dense output slab

    # OpenLayer: h = relu(W_open' @ [x; 1])  -> (CP, TN); row C stays exactly 1.
    h = jnp.maximum(
        jnp.dot(wo_ref[...], x_ref[...], preferred_element_type=jnp.float32), 0.0)

    # Serial forward Euler over local_steps StepLayers (dt and bias pre-folded).
    def body(k, h):
        step = jnp.maximum(
            jnp.dot(ws_ref[k], h, preferred_element_type=jnp.float32), 0.0)
        return h + step            # step[C] == relu(0) == 0 -> ones row preserved

    h = lax.fori_loop(0, local_steps, body, h, unroll=True)

    # CloseLayer as a sublane reduction (b_close rides in wc_ref[C]); lane-dense store.
    o_ref[...] = jnp.sum(h * wc_ref[...], axis=0, keepdims=True)


def _num_tensorcores():
    """Best-effort TensorCore count per device (v7x = 2, earlier gens = 1)."""
    try:
        dev = jax.devices()[0]
        if dev.platform != "tpu":
            return 1
        nc = getattr(dev, "num_cores", None)
        if isinstance(nc, int) and nc > 0:
            return nc
        kind = (getattr(dev, "device_kind", "") or "").lower()
        return 2 if "v7" in kind else 1
    except Exception:  # pragma: no cover - defensive
        return 1


def _pick_tile(n, requested, cores):
    """Lane-dense tile: multiple of 128, capped at 1024 (vreg pressure), never
    larger than needed to cover N; on multi-TC chips shrink only as needed so
    the grid size is a multiple of the core count."""
    t = min(max(128, (int(requested) // 128) * 128), 1024)
    t = min(t, pl.cdiv(n, 128) * 128)            # one tile is enough for small N
    if cores > 1:
        while t > 128 and pl.cdiv(n, t) % cores != 0:
            t -= 128
    return t


def parallel_net_forward(x, params, *, local_steps=8, Tf=1.0, tile_n=1024):
    """x: (N, 2) float32 -> (N, 1) float32."""
    wo, bo, ws, bs, wc, bc = params
    N = x.shape[0]
    C = wo.shape[1]
    S = ws.shape[0]
    dt = Tf / float(local_steps)

    tile_n = _pick_tile(N, tile_n, _num_tensorcores())
    num_tiles = pl.cdiv(N, tile_n)
    n_pad = num_tiles * tile_n

    # Padded channel count: room for the ones row at index C, dense f32 sublanes.
    CP = max(8, ((C + 1 + 7) // 8) * 8)

    # ---- wrapper-side packing (touches only O(S*C*C) weights; effectively free) ----
    # OpenLayer: rows 0..C-1 = [W_open^T | b_open], row C = [0,0,1] keeps the ones row.
    wo_aug = jnp.zeros((CP, 3), jnp.float32)
    wo_aug = wo_aug.at[:C, :2].set(wo.T)
    wo_aug = wo_aug.at[:C, 2].set(bo.reshape(C))
    wo_aug = wo_aug.at[C, 2].set(1.0)

    # StepLayers: dt folded in; bias in column C; rows C..CP-1 exactly zero so the
    # Euler update preserves h[C] == 1.
    ws_aug = jnp.zeros((S, CP, CP), jnp.float32)
    ws_aug = ws_aug.at[:, :C, :C].set(dt * jnp.swapaxes(ws, 1, 2))
    ws_aug = ws_aug.at[:, :C, C].set(dt * bs.reshape(S, C))

    # CloseLayer: b_close rides on the ones row.
    wc_aug = jnp.zeros((CP, 1), jnp.float32)
    wc_aug = wc_aug.at[:C, 0].set(wc.reshape(C))
    wc_aug = wc_aug.at[C, 0].set(bc.reshape(()))

    # Input: batch -> lane axis, pad only if needed, append the ones row.
    # TODO(synk): for production N, produce collocation points in (2, N) layout
    # upstream to avoid this extra transpose pass over x.
    x_t = x.T
    if n_pad != N:
        x_t = jnp.pad(x_t, ((0, 0), (0, n_pad - N)))
    x_aug = jnp.concatenate([x_t, jnp.ones((1, n_pad), jnp.float32)], axis=0)  # (3, n_pad)

    kernel = functools.partial(_parallelnet_kernel, local_steps=local_steps)

    out = pl.pallas_call(
        kernel,
        out_shape=jax.ShapeDtypeStruct((1, n_pad), jnp.float32),
        grid=(num_tiles,),
        in_specs=[
            pl.BlockSpec((3, tile_n),   lambda i: (0, i)),      # x tile (lane-dense)
            pl.BlockSpec((CP, 3),       lambda i: (0, 0)),      # augmented W_open
            pl.BlockSpec((S, CP, CP),   lambda i: (0, 0, 0)),   # dt-scaled W_step stack
            pl.BlockSpec((CP, 1),       lambda i: (0, 0)),      # W_close (+ b_close)
        ],
        out_specs=pl.BlockSpec((1, tile_n), lambda i: (0, i)),  # lane-dense output slab
        compiler_params=pltpu.CompilerParams(
            dimension_semantics=("parallel",)),
    )(x_aug, wo_aug, ws_aug, wc_aug)

    return out[0, :N].reshape(N, 1)


def make_params(key, channels=12, local_steps=8):
    """Deterministic synthetic parameters (PyTorch Linear shapes, stored as (in, out))."""
    k = jax.random.split(key, 6)
    wo = jax.random.normal(k[0], (2, channels), jnp.float32) * 0.5
    bo = jax.random.normal(k[1], (1, channels), jnp.float32) * 0.1
    ws = jax.random.normal(k[2], (local_steps, channels, channels), jnp.float32) * 0.2
    bs = jax.random.normal(k[3], (local_steps, channels), jnp.float32) * 0.1
    wc = jax.random.normal(k[4], (channels, 1), jnp.float32) * 0.5
    bc = jax.random.normal(k[5], (1, 1), jnp.float32) * 0.1
    return wo, bo, ws, bs, wc, bc


def reference_forward(x, params, *, local_steps=8, Tf=1.0):
    wo, bo, ws, bs, wc, bc = params
    dt = Tf / float(local_steps)
    h = jnp.maximum(x @ wo + bo, 0.0)
    for k in range(local_steps):
        h = h + dt * jnp.maximum(h @ ws[k] + bs[k], 0.0)
    return h @ wc + bc


if __name__ == "__main__":
    # TODO(synk): torchbraid.LayerParallel's MGRIT iteration collapses to the serial
    # forward-Euler sweep here (single MPI rank, max_levels=1, max_iters=1).
    channels = 12
    local_steps = 8
    Tf = 1.0
    N = 512  # batch of (x, t) collocation points

    key = jax.random.PRNGKey(0)
    kx, kp = jax.random.split(key)
    x = jax.random.normal(kx, (N, 2), jnp.float32)
    params = make_params(kp, channels=channels, local_steps=local_steps)

    y = parallel_net_forward(x, params, local_steps=local_steps, Tf=Tf)
    y = jax.block_until_ready(y)

    y_ref = reference_forward(x, params, local_steps=local_steps, Tf=Tf)
    assert y.shape == (N, 1)
    assert jnp.allclose(y, y_ref, atol=1e-4, rtol=1e-5), float(jnp.max(jnp.abs(y - y_ref)))

    print("KERNEL_OK")
</pallas_src>

<mosaic_0001>
module attributes {stable_mosaic.version = 11 : i64} {
  func.func @_parallelnet_kernel(%arg0: i32, %arg1: memref<3x512xf32, #tpu.memory_space<vmem>>, %arg2: memref<16x3xf32, #tpu.memory_space<vmem>>, %arg3: memref<8x16x16xf32, #tpu.memory_space<vmem>>, %arg4: memref<16x1xf32, #tpu.memory_space<vmem>>, %arg5: memref<1x512xf32, #tpu.memory_space<vmem>>) attributes {dimension_semantics = [#tpu.dimension_semantics<parallel>], iteration_bounds = array<i64: 1>, scalar_prefetch = 0 : i64, scratch_operands = 0 : i64, tpu.core_type = #tpu.core_type<tc>, window_params = [{transform_indices = @transform_0, window_bounds = array<i64: 3, 512>}, {pipeline_mode = #tpu.pipeline_mode<synchronous>, transform_indices = @transform_1, window_bounds = array<i64: 16, 3>}, {pipeline_mode = #tpu.pipeline_mode<synchronous>, transform_indices = @transform_2, window_bounds = array<i64: 8, 16, 16>}, {pipeline_mode = #tpu.pipeline_mode<synchronous>, transform_indices = @transform_3, window_bounds = array<i64: 16, 1>}, {transform_indices = @transform_4, window_bounds = array<i64: 1, 512>}]} {
    %c0 = arith.constant 0 : index
    %c0_0 = arith.constant 0 : index
    %0 = vector.load %arg2[%c0, %c0_0] : memref<16x3xf32, #tpu.memory_space<vmem>>, vector<16x3xf32>
    %c0_1 = arith.constant 0 : index
    %c0_2 = arith.constant 0 : index
    %1 = vector.load %arg1[%c0_1, %c0_2] : memref<3x512xf32, #tpu.memory_space<vmem>>, vector<3x512xf32>
    %cst = arith.constant dense<0.000000e+00> : vector<16x512xf32>
    %2 = tpu.matmul %0, %1, %cst {dimension_numbers = #tpu.dot_dimension_numbers<[1], [0], [0], [1], [0, 0, 1, 1], [], []>} : vector<16x3xf32>, vector<3x512xf32>, vector<16x512xf32> -> vector<16x512xf32>
    %cst_3 = arith.constant 0.000000e+00 : f32
    %3 = vector.broadcast %cst_3 : f32 to vector<16x512xf32>
    %4 = arith.maximumf %2, %3 : vector<16x512xf32>
    %c0_i32 = arith.constant 0 : i32
    %5 = arith.index_cast %c0_i32 : i32 to index
    %c0_4 = arith.constant 0 : index
    %c0_5 = arith.constant 0 : index
    %6 = vector.load %arg3[%5, %c0_4, %c0_5] : memref<8x16x16xf32, #tpu.memory_space<vmem>>, vector<1x16x16xf32>
    %7 = vector.shape_cast %6 : vector<1x16x16xf32> to vector<16x16xf32>
    %cst_6 = arith.constant dense<0.000000e+00> : vector<16x512xf32>
    %8 = tpu.matmul %7, %4, %cst_6 {dimension_numbers = #tpu.dot_dimension_numbers<[1], [0], [0], [1], [0, 0, 1, 1], [], []>} : vector<16x16xf32>, vector<16x512xf32>, vector<16x512xf32> -> vector<16x512xf32>
    %cst_7 = arith.constant 0.000000e+00 : f32
    %9 = vector.broadcast %cst_7 : f32 to vector<16x512xf32>
    %10 = arith.maximumf %8, %9 : vector<16x512xf32>
    %11 = arith.addf %4, %10 : vector<16x512xf32>
    %c1_i32 = arith.constant 1 : i32
    %12 = arith.index_cast %c1_i32 : i32 to index
    %c0_8 = arith.constant 0 : index
    %c0_9 = arith.constant 0 : index
    %13 = vector.load %arg3[%12, %c0_8, %c0_9] : memref<8x16x16xf32, #tpu.memory_space<vmem>>, vector<1x16x16xf32>
    %14 = vector.shape_cast %13 : vector<1x16x16xf32> to vector<16x16xf32>
    %cst_10 = arith.constant dense<0.000000e+00> : vector<16x512xf32>
    %15 = tpu.matmul %14, %11, %cst_10 {dimension_numbers = #tpu.dot_dimension_numbers<[1], [0], [0], [1], [0, 0, 1, 1], [], []>} : vector<16x16xf32>, vector<16x512xf32>, vector<16x512xf32> -> vector<16x512xf32>
    %cst_11 = arith.constant 0.000000e+00 : f32
    %16 = vector.broadcast %cst_11 : f32 to vector<16x512xf32>
    %17 = arith.maximumf %15, %16 : vector<16x512xf32>
    %18 = arith.addf %11, %17 : vector<16x512xf32>
    %c2_i32 = arith.constant 2 : i32
    %19 = arith.index_cast %c2_i32 : i32 to index
    %c0_12 = arith.constant 0 : index
    %c0_13 = arith.constant 0 : index
    %20 = vector.load %arg3[%19, %c0_12, %c0_13] : memref<8x16x16xf32, #tpu.memory_space<vmem>>, vector<1x16x16xf32>
    %21 = vector.shape_cast %20 : vector<1x16x16xf32> to vector<16x16xf32>
    %cst_14 = arith.constant dense<0.000000e+00> : vector<16x512xf32>
    %22 = tpu.matmul %21, %18, %cst_14 {dimension_numbers = #tpu.dot_dimension_numbers<[1], [0], [0], [1], [0, 0, 1, 1], [], []>} : vector<16x16xf32>, vector<16x512xf32>, vector<16x512xf32> -> vector<16x512xf32>
    %cst_15 = arith.constant 0.000000e+00 : f32
    %23 = vector.broadcast %cst_15 : f32 to vector<16x512xf32>
    %24 = arith.maximumf %22, %23 : vector<16x512xf32>
    %25 = arith.addf %18, %24 : vector<16x512xf32>
    %c3_i32 = arith.constant 3 : i32
    %26 = arith.index_cast %c3_i32 : i32 to index
    %c0_16 = arith.constant 0 : index
    %c0_17 = arith.constant 0 : index
    %27 = vector.load %arg3[%26, %c0_16, %c0_17] : memref<8x16x16xf32, #tpu.memory_space<vmem>>, vector<1x16x16xf32>
    %28 = vector.shape_cast %27 : vector<1x16x16xf32> to vector<16x16xf32>
    %cst_18 = arith.constant dense<0.000000e+00> : vector<16x512xf32>
    %29 = tpu.matmul %28, %25, %cst_18 {dimension_numbers = #tpu.dot_dimension_numbers<[1], [0], [0], [1], [0, 0, 1, 1], [], []>} : vector<16x16xf32>, vector<16x512xf32>, vector<16x512xf32> -> vector<16x512xf32>
    %cst_19 = arith.constant 0.000000e+00 : f32
    %30 = vector.broadcast %cst_19 : f32 to vector<16x512xf32>
    %31 = arith.maximumf %29, %30 : vector<16x512xf32>
    %32 = arith.addf %25, %31 : vector<16x512xf32>
    %c4_i32 = arith.constant 4 : i32
    %33 = arith.index_cast %c4_i32 : i32 to index
    %c0_20 = arith.constant 0 : index
    %c0_21 = arith.constant 0 : index
    %34 = vector.load %arg3[%33, %c0_20, %c0_21] : memref<8x16x16xf32, #tpu.memory_space<vmem>>, vector<1x16x16xf32>
    %35 = vector.shape_cast %34 : vector<1x16x16xf32> to vector<16x16xf32>
    %cst_22 = arith.constant dense<0.000000e+00> : vector<16x512xf32>
    %36 = tpu.matmul %35, %32, %cst_22 {dimension_numbers = #tpu.dot_dimension_numbers<[1], [0], [0], [1], [0, 0, 1, 1], [], []>} : vector<16x16xf32>, vector<16x512xf32>, vector<16x512xf32> -> vector<16x512xf32>
    %cst_23 = arith.constant 0.000000e+00 : f32
    %37 = vector.broadcast %cst_23 : f32 to vector<16x512xf32>
    %38 = arith.maximumf %36, %37 : vector<16x512xf32>
    %39 = arith.addf %32, %38 : vector<16x512xf32>
    %c5_i32 = arith.constant 5 : i32
    %40 = arith.index_cast %c5_i32 : i32 to index
    %c0_24 = arith.constant 0 : index
    %c0_25 = arith.constant 0 : index
    %41 = vector.load %arg3[%40, %c0_24, %c0_25] : memref<8x16x16xf32, #tpu.memory_space<vmem>>, vector<1x16x16xf32>
    %42 = vector.shape_cast %41 : vector<1x16x16xf32> to vector<16x16xf32>
    %cst_26 = arith.constant dense<0.000000e+00> : vector<16x512xf32>
    %43 = tpu.matmul %42, %39, %cst_26 {dimension_numbers = #tpu.dot_dimension_numbers<[1], [0], [0], [1], [0, 0, 1, 1], [], []>} : vector<16x16xf32>, vector<16x512xf32>, vector<16x512xf32> -> vector<16x512xf32>
    %cst_27 = arith.constant 0.000000e+00 : f32
    %44 = vector.broadcast %cst_27 : f32 to vector<16x512xf32>
    %45 = arith.maximumf %43, %44 : vector<16x512xf32>
    %46 = arith.addf %39, %45 : vector<16x512xf32>
    %c6_i32 = arith.constant 6 : i32
    %47 = arith.index_cast %c6_i32 : i32 to index
    %c0_28 = arith.constant 0 : index
    %c0_29 = arith.constant 0 : index
    %48 = vector.load %arg3[%47, %c0_28, %c0_29] : memref<8x16x16xf32, #tpu.memory_space<vmem>>, vector<1x16x16xf32>
    %49 = vector.shape_cast %48 : vector<1x16x16xf32> to vector<16x16xf32>
    %cst_30 = arith.constant dense<0.000000e+00> : vector<16x512xf32>
    %50 = tpu.matmul %49, %46, %cst_30 {dimension_numbers = #tpu.dot_dimension_numbers<[1], [0], [0], [1], [0, 0, 1, 1], [], []>} : vector<16x16xf32>, vector<16x512xf32>, vector<16x512xf32> -> vector<16x512xf32>
    %cst_31 = arith.constant 0.000000e+00 : f32
    %51 = vector.broadcast %cst_31 : f32 to vector<16x512xf32>
    %52 = arith.maximumf %50, %51 : vector<16x512xf32>
    %53 = arith.addf %46, %52 : vector<16x512xf32>
    %c7_i32 = arith.constant 7 : i32
    %54 = arith.index_cast %c7_i32 : i32 to index
    %c0_32 = arith.constant 0 : index
    %c0_33 = arith.constant 0 : index
    %55 = vector.load %arg3[%54, %c0_32, %c0_33] : memref<8x16x16xf32, #tpu.memory_space<vmem>>, vector<1x16x16xf32>
    %56 = vector.shape_cast %55 : vector<1x16x16xf32> to vector<16x16xf32>
    %cst_34 = arith.constant dense<0.000000e+00> : vector<16x512xf32>
    %57 = tpu.matmul %56, %53, %cst_34 {dimension_numbers = #tpu.dot_dimension_numbers<[1], [0], [0], [1], [0, 0, 1, 1], [], []>} : vector<16x16xf32>, vector<16x512xf32>, vector<16x512xf32> -> vector<16x512xf32>
    %cst_35 = arith.constant 0.000000e+00 : f32
    %58 = vector.broadcast %cst_35 : f32 to vector<16x512xf32>
    %59 = arith.maximumf %57, %58 : vector<16x512xf32>
    %60 = arith.addf %53, %59 : vector<16x512xf32>
    %c8_i32 = arith.constant 8 : i32
    %c0_36 = arith.constant 0 : index
    %c0_37 = arith.constant 0 : index
    %61 = vector.load %arg4[%c0_36, %c0_37] : memref<16x1xf32, #tpu.memory_space<vmem>>, vector<16x1xf32>
    %62 = vector.broadcast %61 : vector<16x1xf32> to vector<16x512xf32>
    %63 = arith.mulf %60, %62 : vector<16x512xf32>
    %cst_38 = arith.constant dense<0.000000e+00> : vector<512xf32>
    %64 = vector.multi_reduction <add>, %63, %cst_38 [0] : vector<16x512xf32> to vector<512xf32>
    %65 = vector.shape_cast %64 : vector<512xf32> to vector<1x512xf32>
    %c0_39 = arith.constant 0 : index
    %c0_40 = arith.constant 0 : index
    %66 = vector.load %arg5[%c0_39, %c0_40] : memref<1x512xf32, #tpu.memory_space<vmem>>, vector<1x512xf32>
    tpu.vector_store %arg5[%c0_39, %c0_40], %65 {strides = array<i32>} : memref<1x512xf32, #tpu.memory_space<vmem>>, vector<1x512xf32>,
    return
  }
  func.func @transform_0(%arg0: i32) -> (i32, i32) {
    %c0_i32 = arith.constant 0 : i32
    %c0_i32_0 = arith.constant 0 : i32
    return %c0_i32, %arg0 : i32, i32
  }
  func.func @transform_1(%arg0: i32) -> (i32, i32) {
    %c0_i32 = arith.constant 0 : i32
    %c0_i32_0 = arith.constant 0 : i32
    %c0_i32_1 = arith.constant 0 : i32
    return %c0_i32, %c0_i32_0 : i32, i32
  }
  func.func @transform_2(%arg0: i32) -> (i32, i32, i32) {
    %c0_i32 = arith.constant 0 : i32
    %c0_i32_0 = arith.constant 0 : i32
    %c0_i32_1 = arith.constant 0 : i32
    %c0_i32_2 = arith.constant 0 : i32
    return %c0_i32, %c0_i32_0, %c0_i32_1 : i32, i32, i32
  }
  func.func @transform_3(%arg0: i32) -> (i32, i32) {
    %c0_i32 = arith.constant 0 : i32
    %c0_i32_0 = arith.constant 0 : i32
    %c0_i32_1 = arith.constant 0 : i32
    return %c0_i32, %c0_i32_0 : i32, i32
  }
  func.func @transform_4(%arg0: i32) -> (i32, i32) {
    %c0_i32 = arith.constant 0 : i32
    %c0_i32_0 = arith.constant 0 : i32
    return %c0_i32, %arg0 : i32, i32
  }
}

</mosaic_0001>

<llo_original>
// kernel: tpu_custom_call.1
$region0: #{tpu_custom_call.1}
  #allocation0 [shape = 'u32[]', space=smem, size = 0x4, offset = 0x4, fixed_abs, tag = 'smem constant byte address 0x4 - core index']
  #allocation1 [shape = 'u32[144,128]{1,0:T(1,128)}', space=vmem, size = 0x12000, scoped, tag = 'internal scratch']
  %s0 = inlined_call_operand.vmem [shape: f32[3,512], index: 0, kind: input, shape index: {}]
  %s1 = inlined_call_operand.vmem [shape: f32[16,3], index: 1, kind: input, shape index: {}]
  %s2 = inlined_call_operand.hbm [shape: f32[8,16,16], index: 2, kind: input, shape index: {}]
  %s3 = inlined_call_operand.vmem [shape: f32[16,1], index: 3, kind: input, shape index: {}]
  %s4 = inlined_call_operand.hbm [shape: f32[1,512], index: 4, kind: output, shape index: {}]
  %s5 = sld [smem:[#allocation0]]
  $region30: #{tpu_custom_call.1} parent=0
    _
  %s7 = ssub.s32 1, %s5
  %s8 = scalar_select 0, %s7, %s5
  $region1: #{tpu_custom_call.1} parent=0
    #allocation2 [shape = 'u8[65536]{0}', space=vmem, size = 0x10000, scoped, tag = 'input window, operand 2, single buffered']
    #allocation3 [shape = 's32[1]{0}', space=sflag, size = 0x4, scoped, tag = 'scoped memory for tpu_custom_call.1']
    #allocation4 [shape = 's32[1]{0}', space=sflag, size = 0x4, scoped, tag = 'scoped memory for tpu_custom_call.1']
    #allocation5 [shape = 'u8[2048]{0}', space=vmem, size = 0x800, scoped, tag = 'output window, operand 0, single buffered']
    %9 = vsyncpa [#allocation3], 0
    %10 = vsyncpa [#allocation4], 0
    // Predicated region
    $region2: #{tpu_custom_call.1} parent=1 // pred_check
      _
    $region3: #{tpu_custom_call.1} parent=1 // pred_check_branch
      %12 = sbr.rel (0) target = $region5
    $region4: #{tpu_custom_call.1} parent=1 // pred_region
      _
    $region5: #{tpu_custom_call.1} parent=1 // pred_fallthru
      _
    // Predicated region
    $region6: #{tpu_custom_call.1} parent=1 // pred_check
      _
    $region7: #{tpu_custom_call.1} parent=1 // pred_check_branch
      %14 = sbr.rel (0) target = $region9
    $region8: #{tpu_custom_call.1} parent=1 // pred_region
      _
    $region9: #{tpu_custom_call.1} parent=1 // pred_fallthru
      _
    // Predicated region
    $region10: #{tpu_custom_call.1} parent=1 // pred_check
      _
    $region11: #{tpu_custom_call.1} parent=1 // pred_check_branch
      %16 = sbr.rel (0) target = $region13
    $region12: #{tpu_custom_call.1} parent=1 // pred_region
      %s18 = ssub.s32 2048, 2048
      %19 = vsyncadd [#allocation3], %s18
      %s20 = sshll.u32 [#allocation2], 4
      %s21 = int_to_ptr.vmem [resolvable:$true] %s20
      %26 = dma.hbm_to_vmem [thread:$0]  %s2, 2048, %s21, [#allocation3], 128, 128, 8
    $region13: #{tpu_custom_call.1} parent=1 // pred_fallthru
      _
    // Predicated region
    $region14: #{tpu_custom_call.1} parent=1 // pred_check
      _
    $region15: #{tpu_custom_call.1} parent=1 // pred_check_branch
      %28 = sbr.rel (0) target = $region17
    $region16: #{tpu_custom_call.1} parent=1 // pred_region
      _
    $region17: #{tpu_custom_call.1} parent=1 // pred_fallthru
      _
    // Predicated region
    $region18: #{tpu_custom_call.1} parent=1 // pred_check
      _
    $region19: #{tpu_custom_call.1} parent=1 // pred_check_branch
      %30 = sbr.rel (0) target = $region21
    $region20: #{tpu_custom_call.1} parent=1 // pred_region
      %31 = dma.done [#allocation3], 2048
    $region21: #{tpu_custom_call.1} parent=1 // pred_fallthru
      _
    %v32 = vld [vmem:[%s1] sm:$0xff]
    %v33 = vld [vmem:[%s1 + $0x8] sm:$0xff]
    %v34 = vld [vmem:[%s0] sm:$0x77]
    %v35 = vld [vmem:[%s0 + $0x8] sm:$0x77]
    %v38 = vcombine.high %v34, %v34
    %v39 = vcombine.high %v35, %v35
    %vm40 = vcmask 23552
    %v42 = vsel %vm40, %v32, 0
    %v45 = vsel %vm40, %v33, 0
    %vm47 = vcmask 1042432
    %v48 = vsel %vm47, %v34, 0
    %v50 = vsel %vm47, %v38, 0
    %v52 = vsel %vm47, %v35, 0
    %v54 = vsel %vm47, %v39, 0
    %56 = vmatprep.subr.mxu0 %v50
    %57 = vmatpush1.msra.mxu0 %v48
    %58 = vmatprep.subr.mxu0 0.0
    %59 = vmatpush1.msra.mxu0 0.0
    %60 = vmatprep.subr.mxu0 0.0
    %61 = vmatpush1.msra.mxu0 0.0
    %62 = vmatprep.subr.mxu0 0.0
    %63 = vmatpush1.msra.mxu0 0.0
    %64 = vmatprep.subr.mxu0 0.0
    %65 = vmatpush1.msra.mxu0 0.0
    %66 = vmatprep.subr.mxu0 0.0
    %67 = vmatpush1.msra.mxu0 0.0
    %68 = vmatprep.subr.mxu0 0.0
    %69 = vmatpush1.msra.mxu0 0.0
    %70 = vmatprep.subr.mxu0 0.0
    %71 = vmatpush1.msra.mxu0 0.0
    %72 = vmatprep.subr.mxu0 0.0
    %73 = vmatpush1.msra.mxu0 0.0
    %74 = vmatprep.subr.mxu0 0.0
    %75 = vmatpush1.msra.mxu0 0.0
    %76 = vmatprep.subr.mxu0 0.0
    %77 = vmatpush1.msra.mxu0 0.0
    %78 = vmatprep.subr.mxu0 0.0
    %79 = vmatpush1.msra.mxu0 0.0
    %80 = vmatprep.subr.mxu0 0.0
    %81 = vmatpush1.msra.mxu0 0.0
    %82 = vmatprep.subr.mxu0 0.0
    %83 = vmatpush1.msra.mxu0 0.0
    %84 = vmatprep.subr.mxu0 0.0
    %85 = vmatpush1.msra.mxu0 0.0
    %86 = vmatprep.subr.mxu0 0.0
    %87 = vmatpush1.msra.mxu0 0.0
    %88 = vmatprep.subr.mxu0 0.0
    %89 = vmatpush1.msra.mxu0 0.0
    %90 = vmatprep.subr.mxu0 0.0
    %91 = vmatpush1.msra.mxu0 0.0
    %92 = vmatprep.subr.mxu0 0.0
    %93 = vmatpush1.msra.mxu0 0.0
    %94 = vmatprep.subr.mxu0 0.0
    %95 = vmatpush1.msra.mxu0 0.0
    %96 = vmatprep.subr.mxu0 0.0
    %97 = vmatpush1.msra.mxu0 0.0
    %98 = vmatprep.subr.mxu0 0.0
    %99 = vmatpush1.msra.mxu0 0.0
    %100 = vmatprep.subr.mxu0 0.0
    %101 = vmatpush1.msra.mxu0 0.0
    %102 = vmatprep.subr.mxu0 0.0
    %103 = vmatpush1.msra.mxu0 0.0
    %104 = vmatprep.subr.mxu0 0.0
    %105 = vmatpush1.msra.mxu0 0.0
    %106 = vmatprep.subr.mxu0 0.0
    %107 = vmatpush1.msra.mxu0 0.0
    %108 = vmatprep.subr.mxu0 0.0
    %109 = vmatpush1.msra.mxu0 0.0
    %110 = vmatprep.subr.mxu0 0.0
    %111 = vmatpush1.msra.mxu0 0.0
    %112 = vmatprep.subr.mxu0 0.0
    %113 = vmatpush1.msra.mxu0 0.0
    %114 = vmatprep.subr.mxu0 0.0
    %115 = vmatpush1.msra.mxu0 0.0
    %116 = vmatprep.subr.mxu0 0.0
    %117 = vmatpush1.msra.mxu0 0.0
    %118 = vmatprep.subr.mxu0 0.0
    %119 = vmatpush1.msra.mxu0 0.0
    %120 = vmatprep.mubr.f32.mxu0 0.0
    %121 = vmatmul.mubr.f32.gmra.mrb[0].mxu0 %v42
    %v122 = vpop.f32.mrb[0].mxu0
    %v123 = vadd.f32 0.0, %v122
    %v124 = vpop.f32.mrb[0].mxu0
    %v125 = vadd.f32 0.0, %v124
    %126 = vmatprep.mubr.f32.mxu0 0.0
    %127 = vmatmul.mubr.f32.gmra.mrb[0].mxu0 %v45
    %v128 = vpop.f32.mrb[0].mxu0
    %v129 = vadd.f32 0.0, %v128
    %v130 = vpop.f32.mrb[0].mxu0
    %v131 = vadd.f32 0.0, %v130
    %132 = vdwg.mxu0
    %133 = vmatprep.subr.mxu0 %v54
    %134 = vmatpush1.msra.mxu0 %v52
    %135 = vmatprep.subr.mxu0 0.0
    %136 = vmatpush1.msra.mxu0 0.0
    %137 = vmatprep.subr.mxu0 0.0
    %138 = vmatpush1.msra.mxu0 0.0
    %139 = vmatprep.subr.mxu0 0.0
    %140 = vmatpush1.msra.mxu0 0.0
    %141 = vmatprep.subr.mxu0 0.0
    %142 = vmatpush1.msra.mxu0 0.0
    %143 = vmatprep.subr.mxu0 0.0
    %144 = vmatpush1.msra.mxu0 0.0
    %145 = vmatprep.subr.mxu0 0.0
    %146 = vmatpush1.msra.mxu0 0.0
    %147 = vmatprep.subr.mxu0 0.0
    %148 = vmatpush1.msra.mxu0 0.0
    %149 = vmatprep.subr.mxu0 0.0
    %150 = vmatpush1.msra.mxu0 0.0
    %151 = vmatprep.subr.mxu0 0.0
    %152 = vmatpush1.msra.mxu0 0.0
    %153 = vmatprep.subr.mxu0 0.0
    %154 = vmatpush1.msra.mxu0 0.0
    %155 = vmatprep.subr.mxu0 0.0
    %156 = vmatpush1.msra.mxu0 0.0
    %157 = vmatprep.subr.mxu0 0.0
    %158 = vmatpush1.msra.mxu0 0.0
    %159 = vmatprep.subr.mxu0 0.0
    %160 = vmatpush1.msra.mxu0 0.0
    %161 = vmatprep.subr.mxu0 0.0
    %162 = vmatpush1.msra.mxu0 0.0
    %163 = vmatprep.subr.mxu0 0.0
    %164 = vmatpush1.msra.mxu0 0.0
    %165 = vmatprep.subr.mxu0 0.0
    %166 = vmatpush1.msra.mxu0 0.0
    %167 = vmatprep.subr.mxu0 0.0
    %168 = vmatpush1.msra.mxu0 0.0
    %169 = vmatprep.subr.mxu0 0.0
    %170 = vmatpush1.msra.mxu0 0.0
    %171 = vmatprep.subr.mxu0 0.0
    %172 = vmatpush1.msra.mxu0 0.0
    %173 = vmatprep.subr.mxu0 0.0
    %174 = vmatpush1.msra.mxu0 0.0
    %175 = vmatprep.subr.mxu0 0.0
    %176 = vmatpush1.msra.mxu0 0.0
    %177 = vmatprep.subr.mxu0 0.0
    %178 = vmatpush1.msra.mxu0 0.0
    %179 = vmatprep.subr.mxu0 0.0
    %180 = vmatpush1.msra.mxu0 0.0
    %181 = vmatprep.subr.mxu0 0.0
    %182 = vmatpush1.msra.mxu0 0.0
    %183 = vmatprep.subr.mxu0 0.0
    %184 = vmatpush1.msra.mxu0 0.0
    %185 = vmatprep.subr.mxu0 0.0
    %186 = vmatpush1.msra.mxu0 0.0
    %187 = vmatprep.subr.mxu0 0.0
    %188 = vmatpush1.msra.mxu0 0.0
    %189 = vmatprep.subr.mxu0 0.0
    %190 = vmatpush1.msra.mxu0 0.0
    %191 = vmatprep.subr.mxu0 0.0
    %192 = vmatpush1.msra.mxu0 0.0
    %193 = vmatprep.subr.mxu0 0.0
    %194 = vmatpush1.msra.mxu0 0.0
    %195 = vmatprep.subr.mxu0 0.0
    %196 = vmatpush1.msra.mxu0 0.0
    %197 = vmatprep.mubr.f32.mxu0 0.0
    %198 = vmatmul.mubr.f32.gmra.mrb[0].mxu0 %v42
    %v199 = vpop.f32.mrb[0].mxu0
    %v200 = vadd.f32 0.0, %v199
    %v201 = vpop.f32.mrb[0].mxu0
    %v202 = vadd.f32 0.0, %v201
    %203 = vmatprep.mubr.f32.mxu0 0.0
    %204 = vmatmul.mubr.f32.gmra.mrb[0].mxu0 %v45
    %v205 = vpop.f32.mrb[0].mxu0
    %v206 = vadd.f32 0.0, %v205
    %v207 = vpop.f32.mrb[0].mxu0
    %v208 = vadd.f32 0.0, %v207
    %209 = vdwg.mxu0
    %v210 = vmax.f32 %v123, 0.0
    %v211 = vmax.f32 %v125, 0.0
    %v212 = vmax.f32 %v200, 0.0
    %v213 = vmax.f32 %v202, 0.0
    %v214 = vmax.f32 %v129, 0.0
    %v215 = vmax.f32 %v131, 0.0
    %v216 = vmax.f32 %v206, 0.0
    %v217 = vmax.f32 %v208, 0.0
    %v218 = vld [vmem:[#allocation2] sm:$0xff]
    %v219 = vld [vmem:[#allocation2 + $0x8] sm:$0xff]
    %vm220 = vcmask 130048
    %v222 = vsel %vm220, %v218, 0
    %v225 = vsel %vm220, %v219, 0
    %227 = vmatprep.subr.mxu0 %v211
    %228 = vmatpush1.msra.mxu0 %v210
    %229 = vmatprep.subr.mxu0 %v215
    %230 = vmatpush1.msra.mxu0 %v214
    %231 = vmatprep.subr.mxu0 0.0
    %232 = vmatpush1.msra.mxu0 0.0
    %233 = vmatprep.subr.mxu0 0.0
    %234 = vmatpush1.msra.mxu0 0.0
    %235 = vmatprep.subr.mxu0 0.0
    %236 = vmatpush1.msra.mxu0 0.0
    %237 = vmatprep.subr.mxu0 0.0
    %238 = vmatpush1.msra.mxu0 0.0
    %239 = vmatprep.subr.mxu0 0.0
    %240 = vmatpush1.msra.mxu0 0.0
    %241 = vmatprep.subr.mxu0 0.0
    %242 = vmatpush1.msra.mxu0 0.0
    %243 = vmatprep.subr.mxu0 0.0
    %244 = vmatpush1.msra.mxu0 0.0
    %245 = vmatprep.subr.mxu0 0.0
    %246 = vmatpush1.msra.mxu0 0.0
    %247 = vmatprep.subr.mxu0 0.0
    %248 = vmatpush1.msra.mxu0 0.0
    %249 = vmatprep.subr.mxu0 0.0
    %250 = vmatpush1.msra.mxu0 0.0
    %251 = vmatprep.subr.mxu0 0.0
    %252 = vmatpush1.msra.mxu0 0.0
    %253 = vmatprep.subr.mxu0 0.0
    %254 = vmatpush1.msra.mxu0 0.0
    %255 = vmatprep.subr.mxu0 0.0
    %256 = vmatpush1.msra.mxu0 0.0
    %257 = vmatprep.subr.mxu0 0.0
    %258 = vmatpush1.msra.mxu0 0.0
    %259 = vmatprep.subr.mxu0 0.0
    %260 = vmatpush1.msra.mxu0 0.0
    %261 = vmatprep.subr.mxu0 0.0
    %262 = vmatpush1.msra.mxu0 0.0
    %263 = vmatprep.subr.mxu0 0.0
    %264 = vmatpush1.msra.mxu0 0.0
    %265 = vmatprep.subr.mxu0 0.0
    %266 = vmatpush1.msra.mxu0 0.0
    %267 = vmatprep.subr.mxu0 0.0
    %268 = vmatpush1.msra.mxu0 0.0
    %269 = vmatprep.subr.mxu0 0.0
    %270 = vmatpush1.msra.mxu0 0.0
    %271 = vmatprep.subr.mxu0 0.0
    %272 = vmatpush1.msra.mxu0 0.0
    %273 = vmatprep.subr.mxu0 0.0
    %274 = vmatpush1.msra.mxu0 0.0
    %275 = vmatprep.subr.mxu0 0.0
    %276 = vmatpush1.msra.mxu0 0.0
    %277 = vmatprep.subr.mxu0 0.0
    %278 = vmatpush1.msra.mxu0 0.0
    %279 = vmatprep.subr.mxu0 0.0
    %280 = vmatpush1.msra.mxu0 0.0
    %281 = vmatprep.subr.mxu0 0.0
    %282 = vmatpush1.msra.mxu0 0.0
    %283 = vmatprep.subr.mxu0 0.0
    %284 = vmatpush1.msra.mxu0 0.0
    %285 = vmatprep.subr.mxu0 0.0
    %286 = vmatpush1.msra.mxu0 0.0
    %287 = vmatprep.subr.mxu0 0.0
    %288 = vmatpush1.msra.mxu0 0.0
    %289 = vmatprep.subr.mxu0 0.0
    %290 = vmatpush1.msra.mxu0 0.0
    %291 = vmatprep.mubr.f32.mxu0 0.0
    %292 = vmatmul.mubr.f32.gmra.mrb[0].mxu0 %v222
    %v293 = vpop.f32.mrb[0].mxu0
    %v294 = vadd.f32 0.0, %v293
    %v295 = vpop.f32.mrb[0].mxu0
    %v296 = vadd.f32 0.0, %v295
    %297 = vmatprep.mubr.f32.mxu0 0.0
    %298 = vmatmul.mubr.f32.gmra.mrb[0].mxu0 %v225
    %v299 = vpop.f32.mrb[0].mxu0
    %v300 = vadd.f32 0.0, %v299
    %v301 = vpop.f32.mrb[0].mxu0
    %v302 = vadd.f32 0.0, %v301
    %303 = vdwg.mxu0
    %304 = vmatprep.subr.mxu0 %v213
    %305 = vmatpush1.msra.mxu0 %v212
    %306 = vmatprep.subr.mxu0 %v217
    %307 = vmatpush1.msra.mxu0 %v216
    %308 = vmatprep.subr.mxu0 0.0
    %309 = vmatpush1.msra.mxu0 0.0
    %310 = vmatprep.subr.mxu0 0.0
    %311 = vmatpush1.msra.mxu0 0.0
    %312 = vmatprep.subr.mxu0 0.0
    %313 = vmatpush1.msra.mxu0 0.0
    %314 = vmatprep.subr.mxu0 0.0
    %315 = vmatpush1.msra.mxu0 0.0
    %316 = vmatprep.subr.mxu0 0.0
    %317 = vmatpush1.msra.mxu0 0.0
    %318 = vmatprep.subr.mxu0 0.0
    %319 = vmatpush1.msra.mxu0 0.0
    %320 = vmatprep.subr.mxu0 0.0
    %321 = vmatpush1.msra.mxu0 0.0
    %322 = vmatprep.subr.mxu0 0.0
    %323 = vmatpush1.msra.mxu0 0.0
    %324 = vmatprep.subr.mxu0 0.0
    %325 = vmatpush1.msra.mxu0 0.0
    %326 = vmatprep.subr.mxu0 0.0
    %327 = vmatpush1.msra.mxu0 0.0
    %328 = vmatprep.subr.mxu0 0.0
    %329 = vmatpush1.msra.mxu0 0.0
    %330 = vmatprep.subr.mxu0 0.0
    %331 = vmatpush1.msra.mxu0 0.0
    %332 = vmatprep.subr.mxu0 0.0
    %333 = vmatpush1.msra.mxu0 0.0
    %334 = vmatprep.subr.mxu0 0.0
    %335 = vmatpush1.msra.mxu0 0.0
    %336 = vmatprep.subr.mxu0 0.0
    %337 = vmatpush1.msra.mxu0 0.0
    %338 = vmatprep.subr.mxu0 0.0
    %339 = vmatpush1.msra.mxu0 0.0
    %340 = vmatprep.subr.mxu0 0.0
    %341 = vmatpush1.msra.mxu0 0.0
    %342 = vmatprep.subr.mxu0 0.0
    %343 = vmatpush1.msra.mxu0 0.0
    %344 = vmatprep.subr.mxu0 0.0
    %345 = vmatpush1.msra.mxu0 0.0
    %346 = vmatprep.subr.mxu0 0.0
    %347 = vmatpush1.msra.mxu0 0.0
    %348 = vmatprep.subr.mxu0 0.0
    %349 = vmatpush1.msra.mxu0 0.0
    %350 = vmatprep.subr.mxu0 0.0
    %351 = vmatpush1.msra.mxu0 0.0
    %352 = vmatprep.subr.mxu0 0.0
    %353 = vmatpush1.msra.mxu0 0.0
    %354 = vmatprep.subr.mxu0 0.0
    %355 = vmatpush1.msra.mxu0 0.0
    %356 = vmatprep.subr.mxu0 0.0
    %357 = vmatpush1.msra.mxu0 0.0
    %358 = vmatprep.subr.mxu0 0.0
    %359 = vmatpush1.msra.mxu0 0.0
    %360 = vmatprep.subr.mxu0 0.0
    %361 = vmatpush1.msra.mxu0 0.0
    %362 = vmatprep.subr.mxu0 0.0
    %363 = vmatpush1.msra.mxu0 0.0
    %364 = vmatprep.subr.mxu0 0.0
    %365 = vmatpush1.msra.mxu0 0.0
    %366 = vmatprep.subr.mxu0 0.0
    %367 = vmatpush1.msra.mxu0 0.0
    %368 = vmatprep.mubr.f32.mxu0 0.0
    %369 = vmatmul.mubr.f32.gmra.mrb[0].mxu0 %v222
    %v370 = vpop.f32.mrb[0].mxu0
    %v371 = vadd.f32 0.0, %v370
    %v372 = vpop.f32.mrb[0].mxu0
    %v373 = vadd.f32 0.0, %v372
    %374 = vmatprep.mubr.f32.mxu0 0.0
    %375 = vmatmul.mubr.f32.gmra.mrb[0].mxu0 %v225
    %v376 = vpop.f32.mrb[0].mxu0
    %v377 = vadd.f32 0.0, %v376
    %v378 = vpop.f32.mrb[0].mxu0
    %v379 = vadd.f32 0.0, %v378
    %380 = vdwg.mxu0
    %v381 = vmax.f32 %v294, 0.0
    %v382 = vmax.f32 %v296, 0.0
    %v383 = vmax.f32 %v371, 0.0
    %v384 = vmax.f32 %v373, 0.0
    %v385 = vmax.f32 %v300, 0.0
    %v386 = vmax.f32 %v302, 0.0
    %v387 = vmax.f32 %v377, 0.0
    %v388 = vmax.f32 %v379, 0.0
    %v389 = vadd.f32 %v210, %v381
    %v390 = vadd.f32 %v211, %v382
    %v391 = vadd.f32 %v212, %v383
    %v392 = vadd.f32 %v213, %v384
    %v393 = vadd.f32 %v214, %v385
    %v394 = vadd.f32 %v215, %v386
    %v395 = vadd.f32 %v216, %v387
    %v396 = vadd.f32 %v217, %v388
    %s397 = scalar_lea.vmem [#allocation2], 16
    %v398 = vld [vmem:[%s397] sm:$0xff]
    %v399 = vld [vmem:[%s397 + $0x8] sm:$0xff]
    %v401 = vsel %vm220, %v398, 0
    %v404 = vsel %vm220, %v399, 0
    %406 = vmatprep.subr.mxu0 %v390
    %407 = vmatpush1.msra.mxu0 %v389
    %408 = vmatprep.subr.mxu0 %v394
    %409 = vmatpush1.msra.mxu0 %v393
    %410 = vmatprep.subr.mxu0 0.0
    %411 = vmatpush1.msra.mxu0 0.0
    %412 = vmatprep.subr.mxu0 0.0
    %413 = vmatpush1.msra.mxu0 0.0
    %414 = vmatprep.subr.mxu0 0.0
    %415 = vmatpush1.msra.mxu0 0.0
    %416 = vmatprep.subr.mxu0 0.0
    %417 = vmatpush1.msra.mxu0 0.0
    %418 = vmatprep.subr.mxu0 0.0
    %419 = vmatpush1.msra.mxu0 0.0
    %420 = vmatprep.subr.mxu0 0.0
    %421 = vmatpush1.msra.mxu0 0.0
    %422 = vmatprep.subr.mxu0 0.0
    %423 = vmatpush1.msra.mxu0 0.0
    %424 = vmatprep.subr.mxu0 0.0
    %425 = vmatpush1.msra.mxu0 0.0
    %426 = vmatprep.subr.mxu0 0.0
    %427 = vmatpush1.msra.mxu0 0.0
    %428 = vmatprep.subr.mxu0 0.0
    %429 = vmatpush1.msra.mxu0 0.0
    %430 = vmatprep.subr.mxu0 0.0
    %431 = vmatpush1.msra.mxu0 0.0
    %432 = vmatprep.subr.mxu0 0.0
    %433 = vmatpush1.msra.mxu0 0.0
    %434 = vmatprep.subr.mxu0 0.0
    %435 = vmatpush1.msra.mxu0 0.0
    %436 = vmatprep.subr.mxu0 0.0
    %437 = vmatpush1.msra.mxu0 0.0
    %438 = vmatprep.subr.mxu0 0.0
    %439 = vmatpush1.msra.mxu0 0.0
    %440 = vmatprep.subr.mxu0 0.0
    %441 = vmatpush1.msra.mxu0 0.0
    %442 = vmatprep.subr.mxu0 0.0
    %443 = vmatpush1.msra.mxu0 0.0
    %444 = vmatprep.subr.mxu0 0.0
    %445 = vmatpush1.msra.mxu0 0.0
    %446 = vmatprep.subr.mxu0 0.0
    %447 = vmatpush1.msra.mxu0 0.0
    %448 = vmatprep.subr.mxu0 0.0
    %449 = vmatpush1.msra.mxu0 0.0
    %450 = vmatprep.subr.mxu0 0.0
    %451 = vmatpush1.msra.mxu0 0.0
    %452 = vmatprep.subr.mxu0 0.0
    %453 = vmatpush1.msra.mxu0 0.0
    %454 = vmatprep.subr.mxu0 0.0
    %455 = vmatpush1.msra.mxu0 0.0
    %456 = vmatprep.subr.mxu0 0.0
    %457 = vmatpush1.msra.mxu0 0.0
    %458 = vmatprep.subr.mxu0 0.0
    %459 = vmatpush1.msra.mxu0 0.0
    %460 = vmatprep.subr.mxu0 0.0
    %461 = vmatpush1.msra.mxu0 0.0
    %462 = vmatprep.subr.mxu0 0.0
    %463 = vmatpush1.msra.mxu0 0.0
    %464 = vmatprep.subr.mxu0 0.0
    %465 = vmatpush1.msra.mxu0 0.0
    %466 = vmatprep.subr.mxu0 0.0
    %467 = vmatpush1.msra.mxu0 0.0
    %468 = vmatprep.subr.mxu0 0.0
    %469 = vmatpush1.msra.mxu0 0.0
    %470 = vmatprep.mubr.f32.mxu0 0.0
    %471 = vmatmul.mubr.f32.gmra.mrb[0].mxu0 %v401
    %v472 = vpop.f32.mrb[0].mxu0
    %v473 = vadd.f32 0.0, %v472
    %v474 = vpop.f32.mrb[0].mxu0
    %v475 = vadd.f32 0.0, %v474
    %476 = vmatprep.mubr.f32.mxu0 0.0
    %477 = vmatmul.mubr.f32.gmra.mrb[0].mxu0 %v404
    %v478 = vpop.f32.mrb[0].mxu0
    %v479 = vadd.f32 0.0, %v478
    %v480 = vpop.f32.mrb[0].mxu0
    %v481 = vadd.f32 0.0, %v480
    %482 = vdwg.mxu0
    %483 = vmatprep.subr.mxu0 %v392
    %484 = vmatpush1.msra.mxu0 %v391
    %485 = vmatprep.subr.mxu0 %v396
    %486 = vmatpush1.msra.mxu0 %v395
    %487 = vmatprep.subr.mxu0 0.0
    %488 = vmatpush1.msra.mxu0 0.0
    %489 = vmatprep.subr.mxu0 0.0
    %490 = vmatpush1.msra.mxu0 0.0
    %491 = vmatprep.subr.mxu0 0.0
    %492 = vmatpush1.msra.mxu0 0.0
    %493 = vmatprep.subr.mxu0 0.0
    %494 = vmatpush1.msra.mxu0 0.0
    %495 = vmatprep.subr.mxu0 0.0
    %496 = vmatpush1.msra.mxu0 0.0
    %497 = vmatprep.subr.mxu0 0.0
    %498 = vmatpush1.msra.mxu0 0.0
    %499 = vmatprep.subr.mxu0 0.0
    %500 = vmatpush1.msra.mxu0 0.0
    %501 = vmatprep.subr.mxu0 0.0
    %502 = vmatpush1.msra.mxu0 0.0
    %503 = vmatprep.subr.mxu0 0.0
    %504 = vmatpush1.msra.mxu0 0.0
    %505 = vmatprep.subr.mxu0 0.0
    %506 = vmatpush1.msra.mxu0 0.0
    %507 = vmatprep.subr.mxu0 0.0
    %508 = vmatpush1.msra.mxu0 0.0
    %509 = vmatprep.subr.mxu0 0.0
    %510 = vmatpush1.msra.mxu0 0.0
    %511 = vmatprep.subr.mxu0 0.0
    %512 = vmatpush1.msra.mxu0 0.0
    %513 = vmatprep.subr.mxu0 0.0
    %514 = vmatpush1.msra.mxu0 0.0
    %515 = vmatprep.subr.mxu0 0.0
    %516 = vmatpush1.msra.mxu0 0.0
    %517 = vmatprep.subr.mxu0 0.0
    %518 = vmatpush1.msra.mxu0 0.0
    %519 = vmatprep.subr.mxu0 0.0
    %520 = vmatpush1.msra.mxu0 0.0
    %521 = vmatprep.subr.mxu0 0.0
    %522 = vmatpush1.msra.mxu0 0.0
    %523 = vmatprep.subr.mxu0 0.0
    %524 = vmatpush1.msra.mxu0 0.0
    %525 = vmatprep.subr.mxu0 0.0
    %526 = vmatpush1.msra.mxu0 0.0
    %527 = vmatprep.subr.mxu0 0.0
    %528 = vmatpush1.msra.mxu0 0.0
    %529 = vmatprep.subr.mxu0 0.0
    %530 = vmatpush1.msra.mxu0 0.0
    %531 = vmatprep.subr.mxu0 0.0
    %532 = vmatpush1.msra.mxu0 0.0
    %533 = vmatprep.subr.mxu0 0.0
    %534 = vmatpush1.msra.mxu0 0.0
    %535 = vmatprep.subr.mxu0 0.0
    %536 = vmatpush1.msra.mxu0 0.0
    %537 = vmatprep.subr.mxu0 0.0
    %538 = vmatpush1.msra.mxu0 0.0
    %539 = vmatprep.subr.mxu0 0.0
    %540 = vmatpush1.msra.mxu0 0.0
    %541 = vmatprep.subr.mxu0 0.0
    %542 = vmatpush1.msra.mxu0 0.0
    %543 = vmatprep.subr.mxu0 0.0
    %544 = vmatpush1.msra.mxu0 0.0
    %545 = vmatprep.subr.mxu0 0.0
    %546 = vmatpush1.msra.mxu0 0.0
    %547 = vmatprep.mubr.f32.mxu0 0.0
    %548 = vmatmul.mubr.f32.gmra.mrb[0].mxu0 %v401
    %v549 = vpop.f32.mrb[0].mxu0
    %v550 = vadd.f32 0.0, %v549
    %v551 = vpop.f32.mrb[0].mxu0
    %v552 = vadd.f32 0.0, %v551
    %553 = vmatprep.mubr.f32.mxu0 0.0
    %554 = vmatmul.mubr.f32.gmra.mrb[0].mxu0 %v404
    %v555 = vpop.f32.mrb[0].mxu0
    %v556 = vadd.f32 0.0, %v555
    %v557 = vpop.f32.mrb[0].mxu0
    %v558 = vadd.f32 0.0, %v557
    %559 = vdwg.mxu0
    %v560 = vmax.f32 %v473, 0.0
    %v561 = vmax.f32 %v475, 0.0
    %v562 = vmax.f32 %v550, 0.0
    %v563 = vmax.f32 %v552, 0.0
    %v564 = vmax.f32 %v479, 0.0
    %v565 = vmax.f32 %v481, 0.0
    %v566 = vmax.f32 %v556, 0.0
    %v567 = vmax.f32 %v558, 0.0
    %v568 = vadd.f32 %v389, %v560
    %v569 = vadd.f32 %v390, %v561
    %v570 = vadd.f32 %v391, %v562
    %v571 = vadd.f32 %v392, %v563
    %v572 = vadd.f32 %v393, %v564
    %v573 = vadd.f32 %v394, %v565
    %v574 = vadd.f32 %v395, %v566
    %v575 = vadd.f32 %v396, %v567
    %s576 = scalar_lea.vmem [#allocation2], 32
    %v577 = vld [vmem:[%s576] sm:$0xff]
    %v578 = vld [vmem:[%s576 + $0x8] sm:$0xff]
    %v580 = vsel %vm220, %v577, 0
    %v583 = vsel %vm220, %v578, 0
    %585 = vmatprep.subr.mxu0 %v569
    %586 = vmatpush1.msra.mxu0 %v568
    %587 = vmatprep.subr.mxu0 %v573
    %588 = vmatpush1.msra.mxu0 %v572
    %589 = vmatprep.subr.mxu0 0.0
    %590 = vmatpush1.msra.mxu0 0.0
    %591 = vmatprep.subr.mxu0 0.0
    %592 = vmatpush1.msra.mxu0 0.0
    %593 = vmatprep.subr.mxu0 0.0
    %594 = vmatpush1.msra.mxu0 0.0
    %595 = vmatprep.subr.mxu0 0.0
    %596 = vmatpush1.msra.mxu0 0.0
    %597 = vmatprep.subr.mxu0 0.0
    %598 = vmatpush1.msra.mxu0 0.0
    %599 = vmatprep.subr.mxu0 0.0
    %600 = vmatpush1.msra.mxu0 0.0
    %601 = vmatprep.subr.mxu0 0.0
    %602 = vmatpush1.msra.mxu0 0.0
    %603 = vmatprep.subr.mxu0 0.0
    %604 = vmatpush1.msra.mxu0 0.0
    %605 = vmatprep.subr.mxu0 0.0
    %606 = vmatpush1.msra.mxu0 0.0
    %607 = vmatprep.subr.mxu0 0.0
    %608 = vmatpush1.msra.mxu0 0.0
    %609 = vmatprep.subr.mxu0 0.0
    %610 = vmatpush1.msra.mxu0 0.0
    %611 = vmatprep.subr.mxu0 0.0
    %612 = vmatpush1.msra.mxu0 0.0
    %613 = vmatprep.subr.mxu0 0.0
    %614 = vmatpush1.msra.mxu0 0.0
    %615 = vmatprep.subr.mxu0 0.0
    %616 = vmatpush1.msra.mxu0 0.0
    %617 = vmatprep.subr.mxu0 0.0
    %618 = vmatpush1.msra.mxu0 0.0
    %619 = vmatprep.subr.mxu0 0.0
    %620 = vmatpush1.msra.mxu0 0.0
    %621 = vmatprep.subr.mxu0 0.0
    %622 = vmatpush1.msra.mxu0 0.0
    %623 = vmatprep.subr.mxu0 0.0
    %624 = vmatpush1.msra.mxu0 0.0
    %625 = vmatprep.subr.mxu0 0.0
    %626 = vmatpush1.msra.mxu0 0.0
    %627 = vmatprep.subr.mxu0 0.0
    %628 = vmatpush1.msra.mxu0 0.0
    %629 = vmatprep.subr.mxu0 0.0
    %630 = vmatpush1.msra.mxu0 0.0
    %631 = vmatprep.subr.mxu0 0.0
    %632 = vmatpush1.msra.mxu0 0.0
    %633 = vmatprep.subr.mxu0 0.0
    %634 = vmatpush1.msra.mxu0 0.0
    %635 = vmatprep.subr.mxu0 0.0
    %636 = vmatpush1.msra.mxu0 0.0
    %637 = vmatprep.subr.mxu0 0.0
    %638 = vmatpush1.msra.mxu0 0.0
    %639 = vmatprep.subr.mxu0 0.0
    %640 = vmatpush1.msra.mxu0 0.0
    %641 = vmatprep.subr.mxu0 0.0
    %642 = vmatpush1.msra.mxu0 0.0
    %643 = vmatprep.subr.mxu0 0.0
    %644 = vmatpush1.msra.mxu0 0.0
    %645 = vmatprep.subr.mxu0 0.0
    %646 = vmatpush1.msra.mxu0 0.0
    %647 = vmatprep.subr.mxu0 0.0
    %648 = vmatpush1.msra.mxu0 0.0
    %649 = vmatprep.mubr.f32.mxu0 0.0
    %650 = vmatmul.mubr.f32.gmra.mrb[0].mxu0 %v580
    %v651 = vpop.f32.mrb[0].mxu0
    %v652 = vadd.f32 0.0, %v651
    %v653 = vpop.f32.mrb[0].mxu0
    %v654 = vadd.f32 0.0, %v653
    %655 = vmatprep.mubr.f32.mxu0 0.0
    %656 = vmatmul.mubr.f32.gmra.mrb[0].mxu0 %v583
    %v657 = vpop.f32.mrb[0].mxu0
    %v658 = vadd.f32 0.0, %v657
    %v659 = vpop.f32.mrb[0].mxu0
    %v660 = vadd.f32 0.0, %v659
    %661 = vdwg.mxu0
    %662 = vmatprep.subr.mxu0 %v571
    %663 = vmatpush1.msra.mxu0 %v570
    %664 = vmatprep.subr.mxu0 %v575
    %665 = vmatpush1.msra.mxu0 %v574
    %666 = vmatprep.subr.mxu0 0.0
    %667 = vmatpush1.msra.mxu0 0.0
    %668 = vmatprep.subr.mxu0 0.0
    %669 = vmatpush1.msra.mxu0 0.0
    %670 = vmatprep.subr.mxu0 0.0
    %671 = vmatpush1.msra.mxu0 0.0
    %672 = vmatprep.subr.mxu0 0.0
    %673 = vmatpush1.msra.mxu0 0.0
    %674 = vmatprep.subr.mxu0 0.0
    %675 = vmatpush1.msra.mxu0 0.0
    %676 = vmatprep.subr.mxu0 0.0
    %677 = vmatpush1.msra.mxu0 0.0
    %678 = vmatprep.subr.mxu0 0.0
    %679 = vmatpush1.msra.mxu0 0.0
    %680 = vmatprep.subr.mxu0 0.0
    %681 = vmatpush1.msra.mxu0 0.0
    %682 = vmatprep.subr.mxu0 0.0
    %683 = vmatpush1.msra.mxu0 0.0
    %684 = vmatprep.subr.mxu0 0.0
    %685 = vmatpush1.msra.mxu0 0.0
    %686 = vmatprep.subr.mxu0 0.0
    %687 = vmatpush1.msra.mxu0 0.0
    %688 = vmatprep.subr.mxu0 0.0
    %689 = vmatpush1.msra.mxu0 0.0
    %690 = vmatprep.subr.mxu0 0.0
    %691 = vmatpush1.msra.mxu0 0.0
    %692 = vmatprep.subr.mxu0 0.0
    %693 = vmatpush1.msra.mxu0 0.0
    %694 = vmatprep.subr.mxu0 0.0
    %695 = vmatpush1.msra.mxu0 0.0
    %696 = vmatprep.subr.mxu0 0.0
    %697 = vmatpush1.msra.mxu0 0.0
    %698 = vmatprep.subr.mxu0 0.0
    %699 = vmatpush1.msra.mxu0 0.0
    %700 = vmatprep.subr.mxu0 0.0
    %701 = vmatpush1.msra.mxu0 0.0
    %702 = vmatprep.subr.mxu0 0.0
    %703 = vmatpush1.msra.mxu0 0.0
    %704 = vmatprep.subr.mxu0 0.0
    %705 = vmatpush1.msra.mxu0 0.0
    %706 = vmatprep.subr.mxu0 0.0
    %707 = vmatpush1.msra.mxu0 0.0
    %708 = vmatprep.subr.mxu0 0.0
    %709 = vmatpush1.msra.mxu0 0.0
    %710 = vmatprep.subr.mxu0 0.0
    %711 = vmatpush1.msra.mxu0 0.0
    %712 = vmatprep.subr.mxu0 0.0
    %713 = vmatpush1.msra.mxu0 0.0
    %714 = vmatprep.subr.mxu0 0.0
    %715 = vmatpush1.msra.mxu0 0.0
    %716 = vmatprep.subr.mxu0 0.0
    %717 = vmatpush1.msra.mxu0 0.0
    %718 = vmatprep.subr.mxu0 0.0
    %719 = vmatpush1.msra.mxu0 0.0
    %720 = vmatprep.subr.mxu0 0.0
    %721 = vmatpush1.msra.mxu0 0.0
    %722 = vmatprep.subr.mxu0 0.0
    %723 = vmatpush1.msra.mxu0 0.0
    %724 = vmatprep.subr.mxu0 0.0
    %725 = vmatpush1.msra.mxu0 0.0
    %726 = vmatprep.mubr.f32.mxu0 0.0
    %727 = vmatmul.mubr.f32.gmra.mrb[0].mxu0 %v580
    %v728 = vpop.f32.mrb[0].mxu0
    %v729 = vadd.f32 0.0, %v728
    %v730 = vpop.f32.mrb[0].mxu0
    %v731 = vadd.f32 0.0, %v730
    %732 = vmatprep.mubr.f32.mxu0 0.0
    %733 = vmatmul.mubr.f32.gmra.mrb[0].mxu0 %v583
    %v734 = vpop.f32.mrb[0].mxu0
    %v735 = vadd.f32 0.0, %v734
    %v736 = vpop.f32.mrb[0].mxu0
    %v737 = vadd.f32 0.0, %v736
    %738 = vdwg.mxu0
    %v739 = vmax.f32 %v652, 0.0
    %v740 = vmax.f32 %v654, 0.0
    %v741 = vmax.f32 %v729, 0.0
    %v742 = vmax.f32 %v731, 0.0
    %v743 = vmax.f32 %v658, 0.0
    %v744 = vmax.f32 %v660, 0.0
    %v745 = vmax.f32 %v735, 0.0
    %v746 = vmax.f32 %v737, 0.0
    %v747 = vadd.f32 %v568, %v739
    %v748 = vadd.f32 %v569, %v740
    %v749 = vadd.f32 %v570, %v741
    %v750 = vadd.f32 %v571, %v742
    %v751 = vadd.f32 %v572, %v743
    %v752 = vadd.f32 %v573, %v744
    %v753 = vadd.f32 %v574, %v745
    %v754 = vadd.f32 %v575, %v746
    %s755 = scalar_lea.vmem [#allocation2], 48
    %v756 = vld [vmem:[%s755] sm:$0xff]
    %v757 = vld [vmem:[%s755 + $0x8] sm:$0xff]
    %v759 = vsel %vm220, %v756, 0
    %v762 = vsel %vm220, %v757, 0
    %764 = vmatprep.subr.mxu0 %v748
    %765 = vmatpush1.msra.mxu0 %v747
    %766 = vmatprep.subr.mxu0 %v752
    %767 = vmatpush1.msra.mxu0 %v751
    %768 = vmatprep.subr.mxu0 0.0
    %769 = vmatpush1.msra.mxu0 0.0
    %770 = vmatprep.subr.mxu0 0.0
    %771 = vmatpush1.msra.mxu0 0.0
    %772 = vmatprep.subr.mxu0 0.0
    %773 = vmatpush1.msra.mxu0 0.0
    %774 = vmatprep.subr.mxu0 0.0
    %775 = vmatpush1.msra.mxu0 0.0
    %776 = vmatprep.subr.mxu0 0.0
    %777 = vmatpush1.msra.mxu0 0.0
    %778 = vmatprep.subr.mxu0 0.0
    %779 = vmatpush1.msra.mxu0 0.0
    %780 = vmatprep.subr.mxu0 0.0
    %781 = vmatpush1.msra.mxu0 0.0
    %782 = vmatprep.subr.mxu0 0.0
    %783 = vmatpush1.msra.mxu0 0.0
    %784 = vmatprep.subr.mxu0 0.0
    %785 = vmatpush1.msra.mxu0 0.0
    %786 = vmatprep.subr.mxu0 0.0
    %787 = vmatpush1.msra.mxu0 0.0
    %788 = vmatprep.subr.mxu0 0.0
    %789 = vmatpush1.msra.mxu0 0.0
    %790 = vmatprep.subr.mxu0 0.0
    %791 = vmatpush1.msra.mxu0 0.0
    %792 = vmatprep.subr.mxu0 0.0
    %793 = vmatpush1.msra.mxu0 0.0
    %794 = vmatprep.subr.mxu0 0.0
    %795 = vmatpush1.msra.mxu0 0.0
    %796 = vmatprep.subr.mxu0 0.0
    %797 = vmatpush1.msra.mxu0 0.0
    %798 = vmatprep.subr.mxu0 0.0
    %799 = vmatpush1.msra.mxu0 0.0
    %800 = vmatprep.subr.mxu0 0.0
    %801 = vmatpush1.msra.mxu0 0.0
    %802 = vmatprep.subr.mxu0 0.0
    %803 = vmatpush1.msra.mxu0 0.0
    %804 = vmatprep.subr.mxu0 0.0
    %805 = vmatpush1.msra.mxu0 0.0
    %806 = vmatprep.subr.mxu0 0.0
    %807 = vmatpush1.msra.mxu0 0.0
    %808 = vmatprep.subr.mxu0 0.0
    %809 = vmatpush1.msra.mxu0 0.0
    %810 = vmatprep.subr.mxu0 0.0
    %811 = vmatpush1.msra.mxu0 0.0
    %812 = vmatprep.subr.mxu0 0.0
    %813 = vmatpush1.msra.mxu0 0.0
    %814 = vmatprep.subr.mxu0 0.0
    %815 = vmatpush1.msra.mxu0 0.0
    %816 = vmatprep.subr.mxu0 0.0
    %817 = vmatpush1.msra.mxu0 0.0
    %818 = vmatprep.subr.mxu0 0.0
    %819 = vmatpush1.msra.mxu0 0.0
    %820 = vmatprep.subr.mxu0 0.0
    %821 = vmatpush1.msra.mxu0 0.0
    %822 = vmatprep.subr.mxu0 0.0
    %823 = vmatpush1.msra.mxu0 0.0
    %824 = vmatprep.subr.mxu0 0.0
    %825 = vmatpush1.msra.mxu0 0.0
    %826 = vmatprep.subr.mxu0 0.0
    %827 = vmatpush1.msra.mxu0 0.0
    %828 = vmatprep.mubr.f32.mxu0 0.0
    %829 = vmatmul.mubr.f32.gmra.mrb[0].mxu0 %v759
    %v830 = vpop.f32.mrb[0].mxu0
    %v831 = vadd.f32 0.0, %v830
    %v832 = vpop.f32.mrb[0].mxu0
    %v833 = vadd.f32 0.0, %v832
    %834 = vmatprep.mubr.f32.mxu0 0.0
    %835 = vmatmul.mubr.f32.gmra.mrb[0].mxu0 %v762
    %v836 = vpop.f32.mrb[0].mxu0
    %v837 = vadd.f32 0.0, %v836
    %v838 = vpop.f32.mrb[0].mxu0
    %v839 = vadd.f32 0.0, %v838
    %840 = vdwg.mxu0
    %841 = vmatprep.subr.mxu0 %v750
    %842 = vmatpush1.msra.mxu0 %v749
    %843 = vmatprep.subr.mxu0 %v754
    %844 = vmatpush1.msra.mxu0 %v753
    %845 = vmatprep.subr.mxu0 0.0
    %846 = vmatpush1.msra.mxu0 0.0
    %847 = vmatprep.subr.mxu0 0.0
    %848 = vmatpush1.msra.mxu0 0.0
    %849 = vmatprep.subr.mxu0 0.0
    %850 = vmatpush1.msra.mxu0 0.0
    %851 = vmatprep.subr.mxu0 0.0
    %852 = vmatpush1.msra.mxu0 0.0
    %853 = vmatprep.subr.mxu0 0.0
    %854 = vmatpush1.msra.mxu0 0.0
    %855 = vmatprep.subr.mxu0 0.0
    %856 = vmatpush1.msra.mxu0 0.0
    %857 = vmatprep.subr.mxu0 0.0
    %858 = vmatpush1.msra.mxu0 0.0
    %859 = vmatprep.subr.mxu0 0.0
    %860 = vmatpush1.msra.mxu0 0.0
    %861 = vmatprep.subr.mxu0 0.0
    %862 = vmatpush1.msra.mxu0 0.0
    %863 = vmatprep.subr.mxu0 0.0
    %864 = vmatpush1.msra.mxu0 0.0
    %865 = vmatprep.subr.mxu0 0.0
    %866 = vmatpush1.msra.mxu0 0.0
    %867 = vmatprep.subr.mxu0 0.0
    %868 = vmatpush1.msra.mxu0 0.0
    %869 = vmatprep.subr.mxu0 0.0
    %870 = vmatpush1.msra.mxu0 0.0
    %871 = vmatprep.subr.mxu0 0.0
    %872 = vmatpush1.msra.mxu0 0.0
    %873 = vmatprep.subr.mxu0 0.0
    %874 = vmatpush1.msra.mxu0 0.0
    %875 = vmatprep.subr.mxu0 0.0
    %876 = vmatpush1.msra.mxu0 0.0
    %877 = vmatprep.subr.mxu0 0.0
    %878 = vmatpush1.msra.mxu0 0.0
    %879 = vmatprep.subr.mxu0 0.0
    %880 = vmatpush1.msra.mxu0 0.0
    %881 = vmatprep.subr.mxu0 0.0
    %882 = vmatpush1.msra.mxu0 0.0
    %883 = vmatprep.subr.mxu0 0.0
    %884 = vmatpush1.msra.mxu0 0.0
    %885 = vmatprep.subr.mxu0 0.0
    %886 = vmatpush1.msra.mxu0 0.0
    %887 = vmatprep.subr.mxu0 0.0
    %888 = vmatpush1.msra.mxu0 0.0
    %889 = vmatprep.subr.mxu0 0.0
    %890 = vmatpush1.msra.mxu0 0.0
    %891 = vmatprep.subr.mxu0 0.0
    %892 = vmatpush1.msra.mxu0 0.0
    %893 = vmatprep.subr.mxu0 0.0
    %894 = vmatpush1.msra.mxu0 0.0
    %895 = vmatprep.subr.mxu0 0.0
    %896 = vmatpush1.msra.mxu0 0.0
    %897 = vmatprep.subr.mxu0 0.0
    %898 = vmatpush1.msra.mxu0 0.0
    %899 = vmatprep.subr.mxu0 0.0
    %900 = vmatpush1.msra.mxu0 0.0
    %901 = vmatprep.subr.mxu0 0.0
    %902 = vmatpush1.msra.mxu0 0.0
    %903 = vmatprep.subr.mxu0 0.0
    %904 = vmatpush1.msra.mxu0 0.0
    %905 = vmatprep.mubr.f32.mxu0 0.0
    %906 = vmatmul.mubr.f32.gmra.mrb[0].mxu0 %v759
    %v907 = vpop.f32.mrb[0].mxu0
    %v908 = vadd.f32 0.0, %v907
    %v909 = vpop.f32.mrb[0].mxu0
    %v910 = vadd.f32 0.0, %v909
    %911 = vmatprep.mubr.f32.mxu0 0.0
    %912 = vmatmul.mubr.f32.gmra.mrb[0].mxu0 %v762
    %v913 = vpop.f32.mrb[0].mxu0
    %v914 = vadd.f32 0.0, %v913
    %v915 = vpop.f32.mrb[0].mxu0
    %v916 = vadd.f32 0.0, %v915
    %917 = vdwg.mxu0
    %v918 = vmax.f32 %v831, 0.0
    %v919 = vmax.f32 %v833, 0.0
    %v920 = vmax.f32 %v908, 0.0
    %v921 = vmax.f32 %v910, 0.0
    %v922 = vmax.f32 %v837, 0.0
    %v923 = vmax.f32 %v839, 0.0
    %v924 = vmax.f32 %v914, 0.0
    %v925 = vmax.f32 %v916, 0.0
    %v926 = vadd.f32 %v747, %v918
    %v927 = vadd.f32 %v748, %v919
    %v928 = vadd.f32 %v749, %v920
    %v929 = vadd.f32 %v750, %v921
    %v930 = vadd.f32 %v751, %v922
    %v931 = vadd.f32 %v752, %v923
    %v932 = vadd.f32 %v753, %v924
    %v933 = vadd.f32 %v754, %v925
    %s934 = scalar_lea.vmem [#allocation2], 64
    %v935 = vld [vmem:[%s934] sm:$0xff]
    %v936 = vld [vmem:[%s934 + $0x8] sm:$0xff]
    %v938 = vsel %vm220, %v935, 0
    %v941 = vsel %vm220, %v936, 0
    %943 = vmatprep.subr.mxu0 %v927
    %944 = vmatpush1.msra.mxu0 %v926
    %945 = vmatprep.subr.mxu0 %v931
    %946 = vmatpush1.msra.mxu0 %v930
    %947 = vmatprep.subr.mxu0 0.0
    %948 = vmatpush1.msra.mxu0 0.0
    %949 = vmatprep.subr.mxu0 0.0
    %950 = vmatpush1.msra.mxu0 0.0
    %951 = vmatprep.subr.mxu0 0.0
    %952 = vmatpush1.msra.mxu0 0.0
    %953 = vmatprep.subr.mxu0 0.0
    %954 = vmatpush1.msra.mxu0 0.0
    %955 = vmatprep.subr.mxu0 0.0
    %956 = vmatpush1.msra.mxu0 0.0
    %957 = vmatprep.subr.mxu0 0.0
    %958 = vmatpush1.msra.mxu0 0.0
    %959 = vmatprep.subr.mxu0 0.0
    %960 = vmatpush1.msra.mxu0 0.0
    %961 = vmatprep.subr.mxu0 0.0
    %962 = vmatpush1.msra.mxu0 0.0
    %963 = vmatprep.subr.mxu0 0.0
    %964 = vmatpush1.msra.mxu0 0.0
    %965 = vmatprep.subr.mxu0 0.0
    %966 = vmatpush1.msra.mxu0 0.0
    %967 = vmatprep.subr.mxu0 0.0
    %968 = vmatpush1.msra.mxu0 0.0
    %969 = vmatprep.subr.mxu0 0.0
    %970 = vmatpush1.msra.mxu0 0.0
    %971 = vmatprep.subr.mxu0 0.0
    %972 = vmatpush1.msra.mxu0 0.0
    %973 = vmatprep.subr.mxu0 0.0
    %974 = vmatpush1.msra.mxu0 0.0
    %975 = vmatprep.subr.mxu0 0.0
    %976 = vmatpush1.msra.mxu0 0.0
    %977 = vmatprep.subr.mxu0 0.0
    %978 = vmatpush1.msra.mxu0 0.0
    %979 = vmatprep.subr.mxu0 0.0
    %980 = vmatpush1.msra.mxu0 0.0
    %981 = vmatprep.subr.mxu0 0.0
    %982 = vmatpush1.msra.mxu0 0.0
    %983 = vmatprep.subr.mxu0 0.0
    %984 = vmatpush1.msra.mxu0 0.0
    %985 = vmatprep.subr.mxu0 0.0
    %986 = vmatpush1.msra.mxu0 0.0
    %987 = vmatprep.subr.mxu0 0.0
    %988 = vmatpush1.msra.mxu0 0.0
    %989 = vmatprep.subr.mxu0 0.0
    %990 = vmatpush1.msra.mxu0 0.0
    %991 = vmatprep.subr.mxu0 0.0
    %992 = vmatpush1.msra.mxu0 0.0
    %993 = vmatprep.subr.mxu0 0.0
    %994 = vmatpush1.msra.mxu0 0.0
    %995 = vmatprep.subr.mxu0 0.0
    %996 = vmatpush1.msra.mxu0 0.0
    %997 = vmatprep.subr.mxu0 0.0
    %998 = vmatpush1.msra.mxu0 0.0
    %999 = vmatprep.subr.mxu0 0.0
    %1000 = vmatpush1.msra.mxu0 0.0
    %1001 = vmatprep.subr.mxu0 0.0
    %1002 = vmatpush1.msra.mxu0 0.0
    %1003 = vmatprep.subr.mxu0 0.0
    %1004 = vmatpush1.msra.mxu0 0.0
    %1005 = vmatprep.subr.mxu0 0.0
    %1006 = vmatpush1.msra.mxu0 0.0
    %1007 = vmatprep.mubr.f32.mxu0 0.0
    %1008 = vmatmul.mubr.f32.gmra.mrb[0].mxu0 %v938
    %v1009 = vpop.f32.mrb[0].mxu0
    %v1010 = vadd.f32 0.0, %v1009
    %v1011 = vpop.f32.mrb[0].mxu0
    %v1012 = vadd.f32 0.0, %v1011
    %1013 = vmatprep.mubr.f32.mxu0 0.0
    %1014 = vmatmul.mubr.f32.gmra.mrb[0].mxu0 %v941
    %v1015 = vpop.f32.mrb[0].mxu0
    %v1016 = vadd.f32 0.0, %v1015
    %v1017 = vpop.f32.mrb[0].mxu0
    %v1018 = vadd.f32 0.0, %v1017
    %1019 = vdwg.mxu0
    %1020 = vmatprep.subr.mxu0 %v929
    %1021 = vmatpush1.msra.mxu0 %v928
    %1022 = vmatprep.subr.mxu0 %v933
    %1023 = vmatpush1.msra.mxu0 %v932
    %1024 = vmatprep.subr.mxu0 0.0
    %1025 = vmatpush1.msra.mxu0 0.0
    %1026 = vmatprep.subr.mxu0 0.0
    %1027 = vmatpush1.msra.mxu0 0.0
    %1028 = vmatprep.subr.mxu0 0.0
    %1029 = vmatpush1.msra.mxu0 0.0
    %1030 = vmatprep.subr.mxu0 0.0
    %1031 = vmatpush1.msra.mxu0 0.0
    %1032 = vmatprep.subr.mxu0 0.0
    %1033 = vmatpush1.msra.mxu0 0.0
    %1034 = vmatprep.subr.mxu0 0.0
    %1035 = vmatpush1.msra.mxu0 0.0
    %1036 = vmatprep.subr.mxu0 0.0
    %1037 = vmatpush1.msra.mxu0 0.0
    %1038 = vmatprep.subr.mxu0 0.0
    %1039 = vmatpush1.msra.mxu0 0.0
    %1040 = vmatprep.subr.mxu0 0.0
    %1041 = vmatpush1.msra.mxu0 0.0
    %1042 = vmatprep.subr.mxu0 0.0
    %1043 = vmatpush1.msra.mxu0 0.0
    %1044 = vmatprep.subr.mxu0 0.0
    %1045 = vmatpush1.msra.mxu0 0.0
    %1046 = vmatprep.subr.mxu0 0.0
    %1047 = vmatpush1.msra.mxu0 0.0
    %1048 = vmatprep.subr.mxu0 0.0
    %1049 = vmatpush1.msra.mxu0 0.0
    %1050 = vmatprep.subr.mxu0 0.0
    %1051 = vmatpush1.msra.mxu0 0.0
    %1052 = vmatprep.subr.mxu0 0.0
    %1053 = vmatpush1.msra.mxu0 0.0
    %1054 = vmatprep.subr.mxu0 0.0
    %1055 = vmatpush1.msra.mxu0 0.0
    %1056 = vmatprep.subr.mxu0 0.0
    %1057 = vmatpush1.msra.mxu0 0.0
    %1058 = vmatprep.subr.mxu0 0.0
    %1059 = vmatpush1.msra.mxu0 0.0
    %1060 = vmatprep.subr.mxu0 0.0
    %1061 = vmatpush1.msra.mxu0 0.0
    %1062 = vmatprep.subr.mxu0 0.0
    %1063 = vmatpush1.msra.mxu0 0.0
    %1064 = vmatprep.subr.mxu0 0.0
    %1065 = vmatpush1.msra.mxu0 0.0
    %1066 = vmatprep.subr.mxu0 0.0
    %1067 = vmatpush1.msra.mxu0 0.0
    %1068 = vmatprep.subr.mxu0 0.0
    %1069 = vmatpush1.msra.mxu0 0.0
    %1070 = vmatprep.subr.mxu0 0.0
    %1071 = vmatpush1.msra.mxu0 0.0
    %1072 = vmatprep.subr.mxu0 0.0
    %1073 = vmatpush1.msra.mxu0 0.0
    %1074 = vmatprep.subr.mxu0 0.0
    %1075 = vmatpush1.msra.mxu0 0.0
    %1076 = vmatprep.subr.mxu0 0.0
    %1077 = vmatpush1.msra.mxu0 0.0
    %1078 = vmatprep.subr.mxu0 0.0
    %1079 = vmatpush1.msra.mxu0 0.0
    %1080 = vmatprep.subr.mxu0 0.0
    %1081 = vmatpush1.msra.mxu0 0.0
    %1082 = vmatprep.subr.mxu0 0.0
    %1083 = vmatpush1.msra.mxu0 0.0
    %1084 = vmatprep.mubr.f32.mxu0 0.0
    %1085 = vmatmul.mubr.f32.gmra.mrb[0].mxu0 %v938
    %v1086 = vpop.f32.mrb[0].mxu0
    %v1087 = vadd.f32 0.0, %v1086
    %v1088 = vpop.f32.mrb[0].mxu0
    %v1089 = vadd.f32 0.0, %v1088
    %1090 = vmatprep.mubr.f32.mxu0 0.0
    %1091 = vmatmul.mubr.f32.gmra.mrb[0].mxu0 %v941
    %v1092 = vpop.f32.mrb[0].mxu0
    %v1093 = vadd.f32 0.0, %v1092
    %v1094 = vpop.f32.mrb[0].mxu0
    %v1095 = vadd.f32 0.0, %v1094
    %1096 = vdwg.mxu0
    %v1097 = vmax.f32 %v1010, 0.0
    %v1098 = vmax.f32 %v1012, 0.0
    %v1099 = vmax.f32 %v1087, 0.0
    %v1100 = vmax.f32 %v1089, 0.0
    %v1101 = vmax.f32 %v1016, 0.0
    %v1102 = vmax.f32 %v1018, 0.0
    %v1103 = vmax.f32 %v1093, 0.0
    %v1104 = vmax.f32 %v1095, 0.0
    %v1105 = vadd.f32 %v926, %v1097
    %v1106 = vadd.f32 %v927, %v1098
    %v1107 = vadd.f32 %v928, %v1099
    %v1108 = vadd.f32 %v929, %v1100
    %v1109 = vadd.f32 %v930, %v1101
    %v1110 = vadd.f32 %v931, %v1102
    %v1111 = vadd.f32 %v932, %v1103
    %v1112 = vadd.f32 %v933, %v1104
    %s1113 = scalar_lea.vmem [#allocation2], 80
    %v1114 = vld [vmem:[%s1113] sm:$0xff]
    %v1115 = vld [vmem:[%s1113 + $0x8] sm:$0xff]
    %v1117 = vsel %vm220, %v1114, 0
    %v1120 = vsel %vm220, %v1115, 0
    %1122 = vmatprep.subr.mxu0 %v1106
    %1123 = vmatpush1.msra.mxu0 %v1105
    %1124 = vmatprep.subr.mxu0 %v1110
    %1125 = vmatpush1.msra.mxu0 %v1109
    %1126 = vmatprep.subr.mxu0 0.0
    %1127 = vmatpush1.msra.mxu0 0.0
    %1128 = vmatprep.subr.mxu0 0.0
    %1129 = vmatpush1.msra.mxu0 0.0
    %1130 = vmatprep.subr.mxu0 0.0
    %1131 = vmatpush1.msra.mxu0 0.0
    %1132 = vmatprep.subr.mxu0 0.0
    %1133 = vmatpush1.msra.mxu0 0.0
    %1134 = vmatprep.subr.mxu0 0.0
    %1135 = vmatpush1.msra.mxu0 0.0
    %1136 = vmatprep.subr.mxu0 0.0
    %1137 = vmatpush1.msra.mxu0 0.0
    %1138 = vmatprep.subr.mxu0 0.0
    %1139 = vmatpush1.msra.mxu0 0.0
    %1140 = vmatprep.subr.mxu0 0.0
    %1141 = vmatpush1.msra.mxu0 0.0
    %1142 = vmatprep.subr.mxu0 0.0
    %1143 = vmatpush1.msra.mxu0 0.0
    %1144 = vmatprep.subr.mxu0 0.0
    %1145 = vmatpush1.msra.mxu0 0.0
    %1146 = vmatprep.subr.mxu0 0.0
    %1147 = vmatpush1.msra.mxu0 0.0
    %1148 = vmatprep.subr.mxu0 0.0
    %1149 = vmatpush1.msra.mxu0 0.0
    %1150 = vmatprep.subr.mxu0 0.0
    %1151 = vmatpush1.msra.mxu0 0.0
    %1152 = vmatprep.subr.mxu0 0.0
    %1153 = vmatpush1.msra.mxu0 0.0
    %1154 = vmatprep.subr.mxu0 0.0
    %1155 = vmatpush1.msra.mxu0 0.0
    %1156 = vmatprep.subr.mxu0 0.0
    %1157 = vmatpush1.msra.mxu0 0.0
    %1158 = vmatprep.subr.mxu0 0.0
    %1159 = vmatpush1.msra.mxu0 0.0
    %1160 = vmatprep.subr.mxu0 0.0
    %1161 = vmatpush1.msra.mxu0 0.0
    %1162 = vmatprep.subr.mxu0 0.0
    %1163 = vmatpush1.msra.mxu0 0.0
    %1164 = vmatprep.subr.mxu0 0.0
    %1165 = vmatpush1.msra.mxu0 0.0
    %1166 = vmatprep.subr.mxu0 0.0
    %1167 = vmatpush1.msra.mxu0 0.0
    %1168 = vmatprep.subr.mxu0 0.0
    %1169 = vmatpush1.msra.mxu0 0.0
    %1170 = vmatprep.subr.mxu0 0.0
    %1171 = vmatpush1.msra.mxu0 0.0
    %1172 = vmatprep.subr.mxu0 0.0
    %1173 = vmatpush1.msra.mxu0 0.0
    %1174 = vmatprep.subr.mxu0 0.0
    %1175 = vmatpush1.msra.mxu0 0.0
    %1176 = vmatprep.subr.mxu0 0.0
    %1177 = vmatpush1.msra.mxu0 0.0
    %1178 = vmatprep.subr.mxu0 0.0
    %1179 = vmatpush1.msra.mxu0 0.0
    %1180 = vmatprep.subr.mxu0 0.0
    %1181 = vmatpush1.msra.mxu0 0.0
    %1182 = vmatprep.subr.mxu0 0.0
    %1183 = vmatpush1.msra.mxu0 0.0
    %1184 = vmatprep.subr.mxu0 0.0
    %1185 = vmatpush1.msra.mxu0 0.0
    %1186 = vmatprep.mubr.f32.mxu0 0.0
    %1187 = vmatmul.mubr.f32.gmra.mrb[0].mxu0 %v1117
    %v1188 = vpop.f32.mrb[0].mxu0
    %v1189 = vadd.f32 0.0, %v1188
    %v1190 = vpop.f32.mrb[0].mxu0
    %v1191 = vadd.f32 0.0, %v1190
    %1192 = vmatprep.mubr.f32.mxu0 0.0
    %1193 = vmatmul.mubr.f32.gmra.mrb[0].mxu0 %v1120
    %v1194 = vpop.f32.mrb[0].mxu0
    %v1195 = vadd.f32 0.0, %v1194
    %v1196 = vpop.f32.mrb[0].mxu0
    %v1197 = vadd.f32 0.0, %v1196
    %1198 = vdwg.mxu0
    %1199 = vmatprep.subr.mxu0 %v1108
    %1200 = vmatpush1.msra.mxu0 %v1107
    %1201 = vmatprep.subr.mxu0 %v1112
    %1202 = vmatpush1.msra.mxu0 %v1111
    %1203 = vmatprep.subr.mxu0 0.0
    %1204 = vmatpush1.msra.mxu0 0.0
    %1205 = vmatprep.subr.mxu0 0.0
    %1206 = vmatpush1.msra.mxu0 0.0
    %1207 = vmatprep.subr.mxu0 0.0
    %1208 = vmatpush1.msra.mxu0 0.0
    %1209 = vmatprep.subr.mxu0 0.0
    %1210 = vmatpush1.msra.mxu0 0.0
    %1211 = vmatprep.subr.mxu0 0.0
    %1212 = vmatpush1.msra.mxu0 0.0
    %1213 = vmatprep.subr.mxu0 0.0
    %1214 = vmatpush1.msra.mxu0 0.0
    %1215 = vmatprep.subr.mxu0 0.0
    %1216 = vmatpush1.msra.mxu0 0.0
    %1217 = vmatprep.subr.mxu0 0.0
    %1218 = vmatpush1.msra.mxu0 0.0
    %1219 = vmatprep.subr.mxu0 0.0
    %1220 = vmatpush1.msra.mxu0 0.0
    %1221 = vmatprep.subr.mxu0 0.0
    %1222 = vmatpush1.msra.mxu0 0.0
    %1223 = vmatprep.subr.mxu0 0.0
    %1224 = vmatpush1.msra.mxu0 0.0
    %1225 = vmatprep.subr.mxu0 0.0
    %1226 = vmatpush1.msra.mxu0 0.0
    %1227 = vmatprep.subr.mxu0 0.0
    %1228 = vmatpush1.msra.mxu0 0.0
    %1229 = vmatprep.subr.mxu0 0.0
    %1230 = vmatpush1.msra.mxu0 0.0
    %1231 = vmatprep.subr.mxu0 0.0
    %1232 = vmatpush1.msra.mxu0 0.0
    %1233 = vmatprep.subr.mxu0 0.0
    %1234 = vmatpush1.msra.mxu0 0.0
    %1235 = vmatprep.subr.mxu0 0.0
    %1236 = vmatpush1.msra.mxu0 0.0
    %1237 = vmatprep.subr.mxu0 0.0
    %1238 = vmatpush1.msra.mxu0 0.0
    %1239 = vmatprep.subr.mxu0 0.0
    %1240 = vmatpush1.msra.mxu0 0.0
    %1241 = vmatprep.subr.mxu0 0.0
    %1242 = vmatpush1.msra.mxu0 0.0
    %1243 = vmatprep.subr.mxu0 0.0
    %1244 = vmatpush1.msra.mxu0 0.0
    %1245 = vmatprep.subr.mxu0 0.0
    %1246 = vmatpush1.msra.mxu0 0.0
    %1247 = vmatprep.subr.mxu0 0.0
    %1248 = vmatpush1.msra.mxu0 0.0
    %1249 = vmatprep.subr.mxu0 0.0
    %1250 = vmatpush1.msra.mxu0 0.0
    %1251 = vmatprep.subr.mxu0 0.0
    %1252 = vmatpush1.msra.mxu0 0.0
    %1253 = vmatprep.subr.mxu0 0.0
    %1254 = vmatpush1.msra.mxu0 0.0
    %1255 = vmatprep.subr.mxu0 0.0
    %1256 = vmatpush1.msra.mxu0 0.0
    %1257 = vmatprep.subr.mxu0 0.0
    %1258 = vmatpush1.msra.mxu0 0.0
    %1259 = vmatprep.subr.mxu0 0.0
    %1260 = vmatpush1.msra.mxu0 0.0
    %1261 = vmatprep.subr.mxu0 0.0
    %1262 = vmatpush1.msra.mxu0 0.0
    %1263 = vmatprep.mubr.f32.mxu0 0.0
    %1264 = vmatmul.mubr.f32.gmra.mrb[0].mxu0 %v1117
    %v1265 = vpop.f32.mrb[0].mxu0
    %v1266 = vadd.f32 0.0, %v1265
    %v1267 = vpop.f32.mrb[0].mxu0
    %v1268 = vadd.f32 0.0, %v1267
    %1269 = vmatprep.mubr.f32.mxu0 0.0
    %1270 = vmatmul.mubr.f32.gmra.mrb[0].mxu0 %v1120
    %v1271 = vpop.f32.mrb[0].mxu0
    %v1272 = vadd.f32 0.0, %v1271
    %v1273 = vpop.f32.mrb[0].mxu0
    %v1274 = vadd.f32 0.0, %v1273
    %1275 = vdwg.mxu0
    %v1276 = vmax.f32 %v1189, 0.0
    %v1277 = vmax.f32 %v1191, 0.0
    %v1278 = vmax.f32 %v1266, 0.0
    %v1279 = vmax.f32 %v1268, 0.0
    %v1280 = vmax.f32 %v1195, 0.0
    %v1281 = vmax.f32 %v1197, 0.0
    %v1282 = vmax.f32 %v1272, 0.0
    %v1283 = vmax.f32 %v1274, 0.0
    %v1284 = vadd.f32 %v1105, %v1276
    %v1285 = vadd.f32 %v1106, %v1277
    %v1286 = vadd.f32 %v1107, %v1278
    %v1287 = vadd.f32 %v1108, %v1279
    %v1288 = vadd.f32 %v1109, %v1280
    %v1289 = vadd.f32 %v1110, %v1281
    %v1290 = vadd.f32 %v1111, %v1282
    %v1291 = vadd.f32 %v1112, %v1283
    %s1292 = scalar_lea.vmem [#allocation2], 96
    %v1293 = vld [vmem:[%s1292] sm:$0xff]
    %v1294 = vld [vmem:[%s1292 + $0x8] sm:$0xff]
    %v1296 = vsel %vm220, %v1293, 0
    %v1299 = vsel %vm220, %v1294, 0
    %1301 = vmatprep.subr.mxu0 %v1285
    %1302 = vmatpush1.msra.mxu0 %v1284
    %1303 = vmatprep.subr.mxu0 %v1289
    %1304 = vmatpush1.msra.mxu0 %v1288
    %1305 = vmatprep.subr.mxu0 0.0
    %1306 = vmatpush1.msra.mxu0 0.0
    %1307 = vmatprep.subr.mxu0 0.0
    %1308 = vmatpush1.msra.mxu0 0.0
    %1309 = vmatprep.subr.mxu0 0.0
    %1310 = vmatpush1.msra.mxu0 0.0
    %1311 = vmatprep.subr.mxu0 0.0
    %1312 = vmatpush1.msra.mxu0 0.0
    %1313 = vmatprep.subr.mxu0 0.0
    %1314 = vmatpush1.msra.mxu0 0.0
    %1315 = vmatprep.subr.mxu0 0.0
    %1316 = vmatpush1.msra.mxu0 0.0
    %1317 = vmatprep.subr.mxu0 0.0
    %1318 = vmatpush1.msra.mxu0 0.0
    %1319 = vmatprep.subr.mxu0 0.0
    %1320 = vmatpush1.msra.mxu0 0.0
    %1321 = vmatprep.subr.mxu0 0.0
    %1322 = vmatpush1.msra.mxu0 0.0
    %1323 = vmatprep.subr.mxu0 0.0
    %1324 = vmatpush1.msra.mxu0 0.0
    %1325 = vmatprep.subr.mxu0 0.0
    %1326 = vmatpush1.msra.mxu0 0.0
    %1327 = vmatprep.subr.mxu0 0.0
    %1328 = vmatpush1.msra.mxu0 0.0
    %1329 = vmatprep.subr.mxu0 0.0
    %1330 = vmatpush1.msra.mxu0 0.0
    %1331 = vmatprep.subr.mxu0 0.0
    %1332 = vmatpush1.msra.mxu0 0.0
    %1333 = vmatprep.subr.mxu0 0.0
    %1334 = vmatpush1.msra.mxu0 0.0
    %1335 = vmatprep.subr.mxu0 0.0
    %1336 = vmatpush1.msra.mxu0 0.0
    %1337 = vmatprep.subr.mxu0 0.0
    %1338 = vmatpush1.msra.mxu0 0.0
    %1339 = vmatprep.subr.mxu0 0.0
    %1340 = vmatpush1.msra.mxu0 0.0
    %1341 = vmatprep.subr.mxu0 0.0
    %1342 = vmatpush1.msra.mxu0 0.0
    %1343 = vmatprep.subr.mxu0 0.0
    %1344 = vmatpush1.msra.mxu0 0.0
    %1345 = vmatprep.subr.mxu0 0.0
    %1346 = vmatpush1.msra.mxu0 0.0
    %1347 = vmatprep.subr.mxu0 0.0
    %1348 = vmatpush1.msra.mxu0 0.0
    %1349 = vmatprep.subr.mxu0 0.0
    %1350 = vmatpush1.msra.mxu0 0.0
    %1351 = vmatprep.subr.mxu0 0.0
    %1352 = vmatpush1.msra.mxu0 0.0
    %1353 = vmatprep.subr.mxu0 0.0
    %1354 = vmatpush1.msra.mxu0 0.0
    %1355 = vmatprep.subr.mxu0 0.0
    %1356 = vmatpush1.msra.mxu0 0.0
    %1357 = vmatprep.subr.mxu0 0.0
    %1358 = vmatpush1.msra.mxu0 0.0
    %1359 = vmatprep.subr.mxu0 0.0
    %1360 = vmatpush1.msra.mxu0 0.0
    %1361 = vmatprep.subr.mxu0 0.0
    %1362 = vmatpush1.msra.mxu0 0.0
    %1363 = vmatprep.subr.mxu0 0.0
    %1364 = vmatpush1.msra.mxu0 0.0
    %1365 = vmatprep.mubr.f32.mxu0 0.0
    %1366 = vmatmul.mubr.f32.gmra.mrb[0].mxu0 %v1296
    %v1367 = vpop.f32.mrb[0].mxu0
    %v1368 = vadd.f32 0.0, %v1367
    %v1369 = vpop.f32.mrb[0].mxu0
    %v1370 = vadd.f32 0.0, %v1369
    %1371 = vmatprep.mubr.f32.mxu0 0.0
    %1372 = vmatmul.mubr.f32.gmra.mrb[0].mxu0 %v1299
    %v1373 = vpop.f32.mrb[0].mxu0
    %v1374 = vadd.f32 0.0, %v1373
    %v1375 = vpop.f32.mrb[0].mxu0
    %v1376 = vadd.f32 0.0, %v1375
    %1377 = vdwg.mxu0
    %1378 = vmatprep.subr.mxu0 %v1287
    %1379 = vmatpush1.msra.mxu0 %v1286
    %1380 = vmatprep.subr.mxu0 %v1291
    %1381 = vmatpush1.msra.mxu0 %v1290
    %1382 = vmatprep.subr.mxu0 0.0
    %1383 = vmatpush1.msra.mxu0 0.0
    %1384 = vmatprep.subr.mxu0 0.0
    %1385 = vmatpush1.msra.mxu0 0.0
    %1386 = vmatprep.subr.mxu0 0.0
    %1387 = vmatpush1.msra.mxu0 0.0
    %1388 = vmatprep.subr.mxu0 0.0
    %1389 = vmatpush1.msra.mxu0 0.0
    %1390 = vmatprep.subr.mxu0 0.0
    %1391 = vmatpush1.msra.mxu0 0.0
    %1392 = vmatprep.subr.mxu0 0.0
    %1393 = vmatpush1.msra.mxu0 0.0
    %1394 = vmatprep.subr.mxu0 0.0
    %1395 = vmatpush1.msra.mxu0 0.0
    %1396 = vmatprep.subr.mxu0 0.0
    %1397 = vmatpush1.msra.mxu0 0.0
    %1398 = vmatprep.subr.mxu0 0.0
    %1399 = vmatpush1.msra.mxu0 0.0
    %1400 = vmatprep.subr.mxu0 0.0
    %1401 = vmatpush1.msra.mxu0 0.0
    %1402 = vmatprep.subr.mxu0 0.0
    %1403 = vmatpush1.msra.mxu0 0.0
    %1404 = vmatprep.subr.mxu0 0.0
    %1405 = vmatpush1.msra.mxu0 0.0
    %1406 = vmatprep.subr.mxu0 0.0
    %1407 = vmatpush1.msra.mxu0 0.0
    %1408 = vmatprep.subr.mxu0 0.0
    %1409 = vmatpush1.msra.mxu0 0.0
    %1410 = vmatprep.subr.mxu0 0.0
    %1411 = vmatpush1.msra.mxu0 0.0
    %1412 = vmatprep.subr.mxu0 0.0
    %1413 = vmatpush1.msra.mxu0 0.0
    %1414 = vmatprep.subr.mxu0 0.0
    %1415 = vmatpush1.msra.mxu0 0.0
    %1416 = vmatprep.subr.mxu0 0.0
    %1417 = vmatpush1.msra.mxu0 0.0
    %1418 = vmatprep.subr.mxu0 0.0
    %1419 = vmatpush1.msra.mxu0 0.0
    %1420 = vmatprep.subr.mxu0 0.0
    %1421 = vmatpush1.msra.mxu0 0.0
    %1422 = vmatprep.subr.mxu0 0.0
    %1423 = vmatpush1.msra.mxu0 0.0
    %1424 = vmatprep.subr.mxu0 0.0
    %1425 = vmatpush1.msra.mxu0 0.0
    %1426 = vmatprep.subr.mxu0 0.0
    %1427 = vmatpush1.msra.mxu0 0.0
    %1428 = vmatprep.subr.mxu0 0.0
    %1429 = vmatpush1.msra.mxu0 0.0
    %1430 = vmatprep.subr.mxu0 0.0
    %1431 = vmatpush1.msra.mxu0 0.0
    %1432 = vmatprep.subr.mxu0 0.0
    %1433 = vmatpush1.msra.mxu0 0.0
    %1434 = vmatprep.subr.mxu0 0.0
    %1435 = vmatpush1.msra.mxu0 0.0
    %1436 = vmatprep.subr.mxu0 0.0
    %1437 = vmatpush1.msra.mxu0 0.0
    %1438 = vmatprep.subr.mxu0 0.0
    %1439 = vmatpush1.msra.mxu0 0.0
    %1440 = vmatprep.subr.mxu0 0.0
    %1441 = vmatpush1.msra.mxu0 0.0
    %1442 = vmatprep.mubr.f32.mxu0 0.0
    %1443 = vmatmul.mubr.f32.gmra.mrb[0].mxu0 %v1296
    %v1444 = vpop.f32.mrb[0].mxu0
    %v1445 = vadd.f32 0.0, %v1444
    %v1446 = vpop.f32.mrb[0].mxu0
    %v1447 = vadd.f32 0.0, %v1446
    %1448 = vmatprep.mubr.f32.mxu0 0.0
    %1449 = vmatmul.mubr.f32.gmra.mrb[0].mxu0 %v1299
    %v1450 = vpop.f32.mrb[0].mxu0
    %v1451 = vadd.f32 0.0, %v1450
    %v1452 = vpop.f32.mrb[0].mxu0
    %v1453 = vadd.f32 0.0, %v1452
    %1454 = vdwg.mxu0
    %v1455 = vmax.f32 %v1368, 0.0
    %v1456 = vmax.f32 %v1370, 0.0
    %v1457 = vmax.f32 %v1445, 0.0
    %v1458 = vmax.f32 %v1447, 0.0
    %v1459 = vmax.f32 %v1374, 0.0
    %v1460 = vmax.f32 %v1376, 0.0
    %v1461 = vmax.f32 %v1451, 0.0
    %v1462 = vmax.f32 %v1453, 0.0
    %v1463 = vadd.f32 %v1284, %v1455
    %v1464 = vadd.f32 %v1285, %v1456
    %v1465 = vadd.f32 %v1286, %v1457
    %v1466 = vadd.f32 %v1287, %v1458
    %v1467 = vadd.f32 %v1288, %v1459
    %v1468 = vadd.f32 %v1289, %v1460
    %v1469 = vadd.f32 %v1290, %v1461
    %v1470 = vadd.f32 %v1291, %v1462
    %s1471 = scalar_lea.vmem [#allocation2], 112
    %v1472 = vld [vmem:[%s1471] sm:$0xff]
    %v1473 = vld [vmem:[%s1471 + $0x8] sm:$0xff]
    %v1475 = vsel %vm220, %v1472, 0
    %v1478 = vsel %vm220, %v1473, 0
    %1480 = vmatprep.subr.mxu0 %v1464
    %1481 = vmatpush1.msra.mxu0 %v1463
    %1482 = vmatprep.subr.mxu0 %v1468
    %1483 = vmatpush1.msra.mxu0 %v1467
    %1484 = vmatprep.subr.mxu0 0.0
    %1485 = vmatpush1.msra.mxu0 0.0
    %1486 = vmatprep.subr.mxu0 0.0
    %1487 = vmatpush1.msra.mxu0 0.0
    %1488 = vmatprep.subr.mxu0 0.0
    %1489 = vmatpush1.msra.mxu0 0.0
    %1490 = vmatprep.subr.mxu0 0.0
    %1491 = vmatpush1.msra.mxu0 0.0
    %1492 = vmatprep.subr.mxu0 0.0
    %1493 = vmatpush1.msra.mxu0 0.0
    %1494 = vmatprep.subr.mxu0 0.0
    %1495 = vmatpush1.msra.mxu0 0.0
    %1496 = vmatprep.subr.mxu0 0.0
    %1497 = vmatpush1.msra.mxu0 0.0
    %1498 = vmatprep.subr.mxu0 0.0
    %1499 = vmatpush1.msra.mxu0 0.0
    %1500 = vmatprep.subr.mxu0 0.0
    %1501 = vmatpush1.msra.mxu0 0.0
    %1502 = vmatprep.subr.mxu0 0.0
    %1503 = vmatpush1.msra.mxu0 0.0
    %1504 = vmatprep.subr.mxu0 0.0
    %1505 = vmatpush1.msra.mxu0 0.0
    %1506 = vmatprep.subr.mxu0 0.0
    %1507 = vmatpush1.msra.mxu0 0.0
    %1508 = vmatprep.subr.mxu0 0.0
    %1509 = vmatpush1.msra.mxu0 0.0
    %1510 = vmatprep.subr.mxu0 0.0
    %1511 = vmatpush1.msra.mxu0 0.0
    %1512 = vmatprep.subr.mxu0 0.0
    %1513 = vmatpush1.msra.mxu0 0.0
    %1514 = vmatprep.subr.mxu0 0.0
    %1515 = vmatpush1.msra.mxu0 0.0
    %1516 = vmatprep.subr.mxu0 0.0
    %1517 = vmatpush1.msra.mxu0 0.0
    %1518 = vmatprep.subr.mxu0 0.0
    %1519 = vmatpush1.msra.mxu0 0.0
    %1520 = vmatprep.subr.mxu0 0.0
    %1521 = vmatpush1.msra.mxu0 0.0
    %1522 = vmatprep.subr.mxu0 0.0
    %1523 = vmatpush1.msra.mxu0 0.0
    %1524 = vmatprep.subr.mxu0 0.0
    %1525 = vmatpush1.msra.mxu0 0.0
    %1526 = vmatprep.subr.mxu0 0.0
    %1527 = vmatpush1.msra.mxu0 0.0
    %1528 = vmatprep.subr.mxu0 0.0
    %1529 = vmatpush1.msra.mxu0 0.0
    %1530 = vmatprep.subr.mxu0 0.0
    %1531 = vmatpush1.msra.mxu0 0.0
    %1532 = vmatprep.subr.mxu0 0.0
    %1533 = vmatpush1.msra.mxu0 0.0
    %1534 = vmatprep.subr.mxu0 0.0
    %1535 = vmatpush1.msra.mxu0 0.0
    %1536 = vmatprep.subr.mxu0 0.0
    %1537 = vmatpush1.msra.mxu0 0.0
    %1538 = vmatprep.subr.mxu0 0.0
    %1539 = vmatpush1.msra.mxu0 0.0
    %1540 = vmatprep.subr.mxu0 0.0
    %1541 = vmatpush1.msra.mxu0 0.0
    %1542 = vmatprep.subr.mxu0 0.0
    %1543 = vmatpush1.msra.mxu0 0.0
    %1544 = vmatprep.mubr.f32.mxu0 0.0
    %1545 = vmatmul.mubr.f32.gmra.mrb[0].mxu0 %v1475
    %v1546 = vpop.f32.mrb[0].mxu0
    %v1547 = vadd.f32 0.0, %v1546
    %v1548 = vpop.f32.mrb[0].mxu0
    %v1549 = vadd.f32 0.0, %v1548
    %1550 = vmatprep.mubr.f32.mxu0 0.0
    %1551 = vmatmul.mubr.f32.gmra.mrb[0].mxu0 %v1478
    %v1552 = vpop.f32.mrb[0].mxu0
    %v1553 = vadd.f32 0.0, %v1552
    %v1554 = vpop.f32.mrb[0].mxu0
    %v1555 = vadd.f32 0.0, %v1554
    %1556 = vdwg.mxu0
    %1557 = vmatprep.subr.mxu0 %v1466
    %1558 = vmatpush1.msra.mxu0 %v1465
    %1559 = vmatprep.subr.mxu0 %v1470
    %1560 = vmatpush1.msra.mxu0 %v1469
    %1561 = vmatprep.subr.mxu0 0.0
    %1562 = vmatpush1.msra.mxu0 0.0
    %1563 = vmatprep.subr.mxu0 0.0
    %1564 = vmatpush1.msra.mxu0 0.0
    %1565 = vmatprep.subr.mxu0 0.0
    %1566 = vmatpush1.msra.mxu0 0.0
    %1567 = vmatprep.subr.mxu0 0.0
    %1568 = vmatpush1.msra.mxu0 0.0
    %1569 = vmatprep.subr.mxu0 0.0
    %1570 = vmatpush1.msra.mxu0 0.0
    %1571 = vmatprep.subr.mxu0 0.0
    %1572 = vmatpush1.msra.mxu0 0.0
    %1573 = vmatprep.subr.mxu0 0.0
    %1574 = vmatpush1.msra.mxu0 0.0
    %1575 = vmatprep.subr.mxu0 0.0
    %1576 = vmatpush1.msra.mxu0 0.0
    %1577 = vmatprep.subr.mxu0 0.0
    %1578 = vmatpush1.msra.mxu0 0.0
    %1579 = vmatprep.subr.mxu0 0.0
    %1580 = vmatpush1.msra.mxu0 0.0
    %1581 = vmatprep.subr.mxu0 0.0
    %1582 = vmatpush1.msra.mxu0 0.0
    %1583 = vmatprep.subr.mxu0 0.0
    %1584 = vmatpush1.msra.mxu0 0.0
    %1585 = vmatprep.subr.mxu0 0.0
    %1586 = vmatpush1.msra.mxu0 0.0
    %1587 = vmatprep.subr.mxu0 0.0
    %1588 = vmatpush1.msra.mxu0 0.0
    %1589 = vmatprep.subr.mxu0 0.0
    %1590 = vmatpush1.msra.mxu0 0.0
    %1591 = vmatprep.subr.mxu0 0.0
    %1592 = vmatpush1.msra.mxu0 0.0
    %1593 = vmatprep.subr.mxu0 0.0
    %1594 = vmatpush1.msra.mxu0 0.0
    %1595 = vmatprep.subr.mxu0 0.0
    %1596 = vmatpush1.msra.mxu0 0.0
    %1597 = vmatprep.subr.mxu0 0.0
    %1598 = vmatpush1.msra.mxu0 0.0
    %1599 = vmatprep.subr.mxu0 0.0
    %1600 = vmatpush1.msra.mxu0 0.0
    %1601 = vmatprep.subr.mxu0 0.0
    %1602 = vmatpush1.msra.mxu0 0.0
    %1603 = vmatprep.subr.mxu0 0.0
    %1604 = vmatpush1.msra.mxu0 0.0
    %1605 = vmatprep.subr.mxu0 0.0
    %1606 = vmatpush1.msra.mxu0 0.0
    %1607 = vmatprep.subr.mxu0 0.0
    %1608 = vmatpush1.msra.mxu0 0.0
    %1609 = vmatprep.subr.mxu0 0.0
    %1610 = vmatpush1.msra.mxu0 0.0
    %1611 = vmatprep.subr.mxu0 0.0
    %1612 = vmatpush1.msra.mxu0 0.0
    %1613 = vmatprep.subr.mxu0 0.0
    %1614 = vmatpush1.msra.mxu0 0.0
    %1615 = vmatprep.subr.mxu0 0.0
    %1616 = vmatpush1.msra.mxu0 0.0
    %1617 = vmatprep.subr.mxu0 0.0
    %1618 = vmatpush1.msra.mxu0 0.0
    %1619 = vmatprep.subr.mxu0 0.0
    %1620 = vmatpush1.msra.mxu0 0.0
    %1621 = vmatprep.mubr.f32.mxu0 0.0
    %1622 = vmatmul.mubr.f32.gmra.mrb[0].mxu0 %v1475
    %v1623 = vpop.f32.mrb[0].mxu0
    %v1624 = vadd.f32 0.0, %v1623
    %v1625 = vpop.f32.mrb[0].mxu0
    %v1626 = vadd.f32 0.0, %v1625
    %1627 = vmatprep.mubr.f32.mxu0 0.0
    %1628 = vmatmul.mubr.f32.gmra.mrb[0].mxu0 %v1478
    %v1629 = vpop.f32.mrb[0].mxu0
    %v1630 = vadd.f32 0.0, %v1629
    %v1631 = vpop.f32.mrb[0].mxu0
    %v1632 = vadd.f32 0.0, %v1631
    %1633 = vdwg.mxu0
    %v1634 = vmax.f32 %v1547, 0.0
    %v1635 = vmax.f32 %v1549, 0.0
    %v1636 = vmax.f32 %v1624, 0.0
    %v1637 = vmax.f32 %v1626, 0.0
    %v1638 = vmax.f32 %v1553, 0.0
    %v1639 = vmax.f32 %v1555, 0.0
    %v1640 = vmax.f32 %v1630, 0.0
    %v1641 = vmax.f32 %v1632, 0.0
    %v1642 = vadd.f32 %v1463, %v1634
    %v1643 = vadd.f32 %v1464, %v1635
    %v1644 = vadd.f32 %v1465, %v1636
    %v1645 = vadd.f32 %v1466, %v1637
    %v1646 = vadd.f32 %v1467, %v1638
    %v1647 = vadd.f32 %v1468, %v1639
    %v1648 = vadd.f32 %v1469, %v1640
    %v1649 = vadd.f32 %v1470, %v1641
    %v1650 = vld [vmem:[%s3] sm:$0xff]
    %v1651 = vld [vmem:[%s3 + $0x8] sm:$0xff]
    %1653 = vset.pattern.permute.xlu0 0
    %1654 = vperm.xlu0 %1653, %v1650
    %v1655 = vpop.permute.xlu0 %1654
    %1658 = vset.pattern.permute.xlu0 0
    %1659 = vperm.xlu0 %1658, %v1651
    %v1660 = vpop.permute.xlu0 %1659
    %v1662 = vmul.f32 %v1642, %v1655
    %v1663 = vmul.f32 %v1643, %v1655
    %v1664 = vmul.f32 %v1644, %v1655
    %v1665 = vmul.f32 %v1645, %v1655
    %v1666 = vmul.f32 %v1646, %v1660
    %v1667 = vmul.f32 %v1647, %v1660
    %v1668 = vmul.f32 %v1648, %v1660
    %v1669 = vmul.f32 %v1649, %v1660
    %v1670 = vadd.f32 %v1662, %v1666
    %v1671 = vrot.slane %v1670, 4
    %v1672 = vadd.f32 %v1670, %v1671
    %v1673 = vrot.slane %v1672, 2
    %v1674 = vadd.f32 %v1672, %v1673
    %v1675 = vrot.slane %v1674, 1
    %v1676 = vadd.f32 %v1674, %v1675
    %v1677 = vadd.f32 %v1663, %v1667
    %v1678 = vrot.slane %v1677, 4
    %v1679 = vadd.f32 %v1677, %v1678
    %v1680 = vrot.slane %v1679, 2
    %v1681 = vadd.f32 %v1679, %v1680
    %v1682 = vrot.slane %v1681, 1
    %v1683 = vadd.f32 %v1681, %v1682
    %v1684 = vadd.f32 %v1664, %v1668
    %v1685 = vrot.slane %v1684, 4
    %v1686 = vadd.f32 %v1684, %v1685
    %v1687 = vrot.slane %v1686, 2
    %v1688 = vadd.f32 %v1686, %v1687
    %v1689 = vrot.slane %v1688, 1
    %v1690 = vadd.f32 %v1688, %v1689
    %v1691 = vadd.f32 %v1665, %v1669
    %v1692 = vrot.slane %v1691, 4
    %v1693 = vadd.f32 %v1691, %v1692
    %v1694 = vrot.slane %v1693, 2
    %v1695 = vadd.f32 %v1693, %v1694
    %v1696 = vrot.slane %v1695, 1
    %v1697 = vadd.f32 %v1695, %v1696
    %v1702 = vcombine.low %v1676, %v1683
    %v1703 = vcombine.low %v1690, %v1697
    %v1705 = vunpack.c.l.s4 1966171168
    %v1706 = vunpack.c.0.s8 %v1705
    %v1707 = vlaneseq
    %v1708 = vshrl.u32 %v1707, 7
    %v1709 = vsub.s32 %v1706, %v1708
    %v1710 = vrot.slane %v1702, %v1709
    %v1712 = vunpack.c.l.s4 1966171168
    %v1713 = vunpack.c.0.s8 %v1712
    %v1714 = vlaneseq
    %v1715 = vshrl.u32 %v1714, 7
    %v1716 = vsub.s32 %v1713, %v1715
    %v1717 = vrot.slane %v1703, %v1716
    %v1718 = vcombine.low %v1710, %v1717
    %v1720 = vunpack.c.l.s4 1966171168
    %v1721 = vunpack.c.0.s8 %v1720
    %v1722 = vlaneseq
    %v1723 = vshrl.u32 %v1722, 7
    %v1724 = vsub.s32 %v1721, %v1723
    %v1725 = vrot.slane %v1718, %v1724
    %v1727 = vlaneseq
    %vm1728 = vcmp.ge.s32.totalorder %v1727, 0
    %vm1729 = vcmp.lt.s32.totalorder %v1727, 512
    %vm1730 = vmand %vm1728, %vm1729
    %1731 = vst.msk [vmem:[#allocation5] sm:$0xf] %vm1730, %v1725
    // Predicated region
    $region22: #{tpu_custom_call.1} parent=1 // pred_check
      _
    $region23: #{tpu_custom_call.1} parent=1 // pred_check_branch
      %1733 = sbr.rel (0) target = $region25
    $region24: #{tpu_custom_call.1} parent=1 // pred_region
      %s1735 = ssub.s32 64, 64
      %1736 = vsyncadd [#allocation4], %s1735
      %s1738 = sshll.u32 [#allocation5], 4
      %s1739 = int_to_ptr.vmem [resolvable:$true] %s1738
      %1741 = dma.vmem_to_hbm [thread:$0]  %s1739, 64, %s4, [#allocation4]
    $region25: #{tpu_custom_call.1} parent=1 // pred_fallthru
      _
    // Predicated region
    $region26: #{tpu_custom_call.1} parent=1 // pred_check
      _
    $region27: #{tpu_custom_call.1} parent=1 // pred_check_branch
      %1743 = sbr.rel (0) target = $region29
    $region28: #{tpu_custom_call.1} parent=1 // pred_region
      %1744 = dma.done [#allocation4], 64
    $region29: #{tpu_custom_call.1} parent=1 // pred_fallthru
      _
    %1745 = vsyncpa [#allocation3], 1
    %1746 = vsyncpa [#allocation4], 1

</llo_original>
